<compile_context>
chip_gen: v7x
topology: tpu7x:2x2x1
jax: 0.10.0
libtpu: 0.0.40
codegen_flags: <defaults>
</compile_context>

<pallas_src>
import jax
import jax.numpy as jnp
from jax.experimental import pallas as pl
from jax.experimental.pallas import tpu as pltpu


def _round_up(x, m):
    return (x + m - 1) // m * m


def _choose_m_tiling(m, tm_target=1024):
    """Pick (tm, m_pad) for the lane-dense conv M axis.

    tm is a 128-multiple, padding waste stays < 128 columns per grid step, and
    (when M allows) the grid has >= 2 steps so v7x's two TensorCores both work.
    """
    m128 = _round_up(m, 128)
    if m128 <= 128:
        return m128, m128
    steps = max(2, pl.cdiv(m128, tm_target))
    tm = _round_up(pl.cdiv(m, steps), 128)
    return tm, tm * steps


def _choose_n_tiling(n, tn_target=256):
    """Pick (tn, n_pad) for the batch axis of the fused FC kernel."""
    n8 = _round_up(n, 8)
    if n8 <= tn_target:
        return n8, n8
    steps = pl.cdiv(n8, tn_target)
    tn = _round_up(pl.cdiv(n, steps), 8)
    return tn, tn * steps


# ---------------------------------------------------------------------------
# Pallas kernels
# ---------------------------------------------------------------------------

def _conv_matmul_kernel(w_ref, p_ref, b_ref, o_ref):
    """Lane-dense conv matmul tile: o = relu(W @ patches + b).

    w: (C_out, K_pad) bf16   p: (K_pad, TM) bf16
    b: (C_out, 1)    f32     o: (C_out, TM) bf16   (TM = large spatial axis)
    """
    acc = jnp.dot(w_ref[...], p_ref[...], preferred_element_type=jnp.float32)
    o_ref[...] = jnp.maximum(acc + b_ref[...], 0.0).astype(o_ref.dtype)


def _fc_fused_kernel(x_ref, w3_ref, b3_ref, w4_ref, b4_ref, w5_ref, b5_ref, o_ref):
    """fc1 + fc2 + fc3 fused; weights VMEM-resident, all widths padded to 128.

    x: (TN, 400) bf16, weights bf16, biases f32, output (TN, 128) f32.
    nn.ReLU() followed by nn.LeakyReLU() is just ReLU, so one max per layer.
    """
    h = jnp.dot(x_ref[...], w3_ref[...], preferred_element_type=jnp.float32)
    h = jnp.maximum(h + b3_ref[...], 0.0)                       # fc1: ReLU
    h = jnp.dot(h.astype(jnp.bfloat16), w4_ref[...], preferred_element_type=jnp.float32)
    h = jnp.maximum(h + b4_ref[...], 0.0)                       # fc2: ReLU
    h = jnp.dot(h.astype(jnp.bfloat16), w5_ref[...], preferred_element_type=jnp.float32)
    o_ref[...] = (h + b5_ref[...]).astype(o_ref.dtype)          # fc3: linear


# ---------------------------------------------------------------------------
# Pallas wrappers
# ---------------------------------------------------------------------------

def pallas_conv_matmul(w_t, patches, b, tm):
    """w_t: (C_out, K_pad) bf16, patches: (K_pad, M_pad) bf16, b: (C_out, 1) f32."""
    c_out, k_pad = w_t.shape
    _, m_pad = patches.shape
    return pl.pallas_call(
        _conv_matmul_kernel,
        out_shape=jax.ShapeDtypeStruct((c_out, m_pad), jnp.bfloat16),
        grid=(m_pad // tm,),
        in_specs=[
            pl.BlockSpec((c_out, k_pad), lambda i: (0, 0)),   # weights: VMEM-resident
            pl.BlockSpec((k_pad, tm), lambda i: (0, i)),      # patches: tiled over M
            pl.BlockSpec((c_out, 1), lambda i: (0, 0)),       # bias
        ],
        out_specs=pl.BlockSpec((c_out, tm), lambda i: (0, i)),
        compiler_params=pltpu.CompilerParams(
            dimension_semantics=("parallel",)),
    )(w_t, patches, b)


def pallas_fc_fused(x, w3, b3, w4, b4, w5, b5, num_classes=10):
    """x: (N, 400) bf16; FC widths lane-padded to 128; returns (N, num_classes) f32."""
    n, kin = x.shape
    tn, n_pad = _choose_n_tiling(n)
    if n_pad != n:
        x = jnp.pad(x, ((0, n_pad - n), (0, 0)))
    width = w5.shape[1]                                   # 128 (lane-padded logits)
    out = pl.pallas_call(
        _fc_fused_kernel,
        out_shape=jax.ShapeDtypeStruct((n_pad, width), jnp.float32),
        grid=(n_pad // tn,),
        in_specs=[
            pl.BlockSpec((tn, kin), lambda i: (i, 0)),    # activations: tiled over batch
            pl.BlockSpec(w3.shape, lambda i: (0, 0)),     # weights/biases: VMEM-resident
            pl.BlockSpec(b3.shape, lambda i: (0, 0)),
            pl.BlockSpec(w4.shape, lambda i: (0, 0)),
            pl.BlockSpec(b4.shape, lambda i: (0, 0)),
            pl.BlockSpec(w5.shape, lambda i: (0, 0)),
            pl.BlockSpec(b5.shape, lambda i: (0, 0)),
        ],
        out_specs=pl.BlockSpec((tn, width), lambda i: (i, 0)),
        compiler_params=pltpu.CompilerParams(
            dimension_semantics=("parallel",)),
    )(x.astype(jnp.bfloat16), w3, b3, w4, b4, w5, b5)
    return out[:n, :num_classes]


# ---------------------------------------------------------------------------
# Conv as (transposed) im2col + Pallas matmul; pool in plain JAX (bf16)
# ---------------------------------------------------------------------------

def im2col_t(x, k, pad):
    """x: (C_in, N, H, W) bf16 -> patches (C_in*k*k, N*Ho*Wo) bf16, K ordered (c, ki, kj)."""
    c, n, h, w = x.shape
    if pad:
        x = jnp.pad(x, ((0, 0), (0, 0), (pad, pad), (pad, pad)))
    ho = h + 2 * pad - k + 1
    wo = w + 2 * pad - k + 1
    rows = []
    for ci in range(c):
        for ki in range(k):
            for kj in range(k):
                rows.append(x[ci, :, ki:ki + ho, kj:kj + wo].reshape(-1))
    return jnp.stack(rows, axis=0), ho, wo        # (C*k*k, N*Ho*Wo) bf16


def conv2d_relu_t(x_cnhw, w_t, b, k, pad):
    """x: (C_in, N, H, W) bf16; w_t: (C_out, K_pad) bf16 (zero-padded K); b: (C_out, 1) f32.

    Returns (C_out, N, Ho, Wo) bf16 with fused bias + ReLU.
    """
    c_out, k_pad = w_t.shape
    n = x_cnhw.shape[1]
    # bf16 BEFORE patch construction/padding: only one (already-halved) patch
    # materialization in HBM, no extra pad/cast copies.
    patches, ho, wo = im2col_t(x_cnhw.astype(jnp.bfloat16), k, pad)
    kk, m = patches.shape
    tm, m_pad = _choose_m_tiling(m)
    patches = jnp.pad(patches, ((0, k_pad - kk), (0, m_pad - m)))
    y = pallas_conv_matmul(w_t, patches, b, tm)   # (C_out, M_pad) bf16
    return y[:, :m].reshape(c_out, n, ho, wo)


def maxpool2_cnhw(x):
    """MaxPool2d(2,2) on channel-major (C, N, H, W), bf16. Plain JAX: a Pallas
    launch would cost more than the op at these shapes (per perf review)."""
    c, n, h, w = x.shape
    return x.reshape(c, n, h // 2, 2, w // 2, 2).max(axis=(3, 5))


# ---------------------------------------------------------------------------
# LeNet parameters (deterministic synthetic init) and forward
# ---------------------------------------------------------------------------

def init_params(key):
    keys = jax.random.split(key, 10)

    def w(key, shape, scale=0.05):
        return (scale * jax.random.normal(key, shape)).astype(jnp.float32)

    def pad_to(a, shape):
        return jnp.pad(a, [(0, t - s) for t, s in zip(shape, a.shape)])

    # Conv weights stored transposed (C_out, K) with K ordered (c_in, ki, kj),
    # zero-padded to a sublane-friendly K (25 -> 32, 150 -> 160), bf16 for the MXU.
    params = {
        "w1": pad_to(w(keys[0], (6, 1 * 5 * 5)), (6, 32)).astype(jnp.bfloat16),
        "b1": w(keys[1], (6, 1)),
        "w2": pad_to(w(keys[2], (16, 6 * 5 * 5)), (16, 160)).astype(jnp.bfloat16),
        "b2": w(keys[3], (16, 1)),
        # FC weights bf16, zero-padded to lane-dense 128 widths (120/84/10 -> 128);
        # the padded rows/cols are zero so they contribute nothing through the
        # ReLU chain, and the final logits are sliced back to 10 outside.
        "w3": pad_to(w(keys[4], (400, 120)), (400, 128)).astype(jnp.bfloat16),
        "b3": pad_to(w(keys[5], (1, 120)), (1, 128)),
        "w4": pad_to(w(keys[6], (120, 84)), (128, 128)).astype(jnp.bfloat16),
        "b4": pad_to(w(keys[7], (1, 84)), (1, 128)),
        "w5": pad_to(w(keys[8], (84, 10)), (128, 128)).astype(jnp.bfloat16),
        "b5": pad_to(w(keys[9], (1, 10)), (1, 128)),
    }
    return params


def lenet_forward(params, x):
    # x: (N, 1, 28, 28) NCHW f32. Switch once to channel-major (C, N, H, W) bf16
    # so conv outputs stay lane-dense and no per-layer NCHW transposes are needed.
    n = x.shape[0]
    x = jnp.transpose(x, (1, 0, 2, 3)).astype(jnp.bfloat16)            # (1, N, 28, 28)
    # conv1: Conv(1->6, k5, pad2) + ReLU (Pallas) + MaxPool2 (JAX, bf16)
    y = conv2d_relu_t(x, params["w1"], params["b1"], k=5, pad=2)       # (6, N, 28, 28)
    y = maxpool2_cnhw(y)                                               # (6, N, 14, 14)
    # conv2: Conv(6->16, k5) + ReLU (Pallas) + MaxPool2 (JAX, bf16)
    y = conv2d_relu_t(y, params["w2"], params["b2"], k=5, pad=0)       # (16, N, 10, 10)
    y = maxpool2_cnhw(y)                                               # (16, N, 5, 5)
    # Flatten exactly like PyTorch x.view(N, -1) on NCHW: per-sample order (c, h, w).
    # TODO(synk): channel-major (400, N) FC layout would drop this transpose entirely.
    flat = jnp.transpose(y, (1, 0, 2, 3)).reshape(n, 16 * 5 * 5)       # (N, 400) bf16
    # fc1 (ReLU; LeakyReLU-after-ReLU == identity) + fc2 (ReLU) + fc3, fused & batch-tiled.
    return pallas_fc_fused(flat, params["w3"], params["b3"],
                           params["w4"], params["b4"],
                           params["w5"], params["b5"], num_classes=10)  # (N, 10)


if __name__ == "__main__":
    key = jax.random.PRNGKey(0)
    k_param, k_x = jax.random.split(key)
    params = init_params(k_param)
    # LeNet's fc1 (16*5*5 inputs) implies a 1x28x28 input image.
    x = jax.random.normal(k_x, (2, 1, 28, 28), dtype=jnp.float32)
    out = jax.jit(lenet_forward)(params, x)
    out = jax.block_until_ready(out)
    assert out.shape == (2, 10)
    print("KERNEL_OK")
</pallas_src>

<mosaic_0001>
module attributes {stable_mosaic.version = 11 : i64} {
  func.func @_conv_matmul_kernel(%arg0: i32, %arg1: memref<6x32xbf16, #tpu.memory_space<vmem>>, %arg2: memref<32x896xbf16, #tpu.memory_space<vmem>>, %arg3: memref<6x1xf32, #tpu.memory_space<vmem>>, %arg4: memref<6x896xbf16, #tpu.memory_space<vmem>>) attributes {dimension_semantics = [#tpu.dimension_semantics<parallel>], iteration_bounds = array<i64: 2>, scalar_prefetch = 0 : i64, scratch_operands = 0 : i64, tpu.core_type = #tpu.core_type<tc>, window_params = [{pipeline_mode = #tpu.pipeline_mode<synchronous>, transform_indices = @transform_0, window_bounds = array<i64: 6, 32>}, {transform_indices = @transform_1, window_bounds = array<i64: 32, 896>}, {pipeline_mode = #tpu.pipeline_mode<synchronous>, transform_indices = @transform_2, window_bounds = array<i64: 6, 1>}, {transform_indices = @transform_3, window_bounds = array<i64: 6, 896>}]} {
    %c0 = arith.constant 0 : index
    %c0_0 = arith.constant 0 : index
    %0 = vector.load %arg1[%c0, %c0_0] : memref<6x32xbf16, #tpu.memory_space<vmem>>, vector<6x32xbf16>
    %c0_1 = arith.constant 0 : index
    %c0_2 = arith.constant 0 : index
    %1 = vector.load %arg2[%c0_1, %c0_2] : memref<32x896xbf16, #tpu.memory_space<vmem>>, vector<32x896xbf16>
    %cst = arith.constant dense<0.000000e+00> : vector<6x896xf32>
    %2 = tpu.matmul %0, %1, %cst {dimension_numbers = #tpu.dot_dimension_numbers<[1], [0], [0], [1], [0, 0, 1, 1], [], []>} : vector<6x32xbf16>, vector<32x896xbf16>, vector<6x896xf32> -> vector<6x896xf32>
    %c0_3 = arith.constant 0 : index
    %c0_4 = arith.constant 0 : index
    %3 = vector.load %arg3[%c0_3, %c0_4] : memref<6x1xf32, #tpu.memory_space<vmem>>, vector<6x1xf32>
    %4 = vector.broadcast %3 : vector<6x1xf32> to vector<6x896xf32>
    %5 = arith.addf %2, %4 : vector<6x896xf32>
    %cst_5 = arith.constant 0.000000e+00 : f32
    %6 = vector.broadcast %cst_5 : f32 to vector<6x896xf32>
    %7 = arith.maximumf %5, %6 : vector<6x896xf32>
    %8 = arith.truncf %7 : vector<6x896xf32> to vector<6x896xbf16>
    %c0_6 = arith.constant 0 : index
    %c0_7 = arith.constant 0 : index
    %9 = vector.load %arg4[%c0_6, %c0_7] : memref<6x896xbf16, #tpu.memory_space<vmem>>, vector<6x896xbf16>
    tpu.vector_store %arg4[%c0_6, %c0_7], %8 {strides = array<i32>} : memref<6x896xbf16, #tpu.memory_space<vmem>>, vector<6x896xbf16>,
    return
  }
  func.func @transform_0(%arg0: i32) -> (i32, i32) {
    %c0_i32 = arith.constant 0 : i32
    %c0_i32_0 = arith.constant 0 : i32
    %c0_i32_1 = arith.constant 0 : i32
    return %c0_i32, %c0_i32_0 : i32, i32
  }
  func.func @transform_1(%arg0: i32) -> (i32, i32) {
    %c0_i32 = arith.constant 0 : i32
    %c0_i32_0 = arith.constant 0 : i32
    return %c0_i32, %arg0 : i32, i32
  }
  func.func @transform_2(%arg0: i32) -> (i32, i32) {
    %c0_i32 = arith.constant 0 : i32
    %c0_i32_0 = arith.constant 0 : i32
    %c0_i32_1 = arith.constant 0 : i32
    return %c0_i32, %c0_i32_0 : i32, i32
  }
  func.func @transform_3(%arg0: i32) -> (i32, i32) {
    %c0_i32 = arith.constant 0 : i32
    %c0_i32_0 = arith.constant 0 : i32
    return %c0_i32, %arg0 : i32, i32
  }
}

module attributes {stable_mosaic.version = 11 : i64} {
  func.func @_conv_matmul_kernel(%arg0: i32, %arg1: memref<16x160xbf16, #tpu.memory_space<vmem>>, %arg2: memref<160x128xbf16, #tpu.memory_space<vmem>>, %arg3: memref<16x1xf32, #tpu.memory_space<vmem>>, %arg4: memref<16x128xbf16, #tpu.memory_space<vmem>>) attributes {dimension_semantics = [#tpu.dimension_semantics<parallel>], iteration_bounds = array<i64: 2>, scalar_prefetch = 0 : i64, scratch_operands = 0 : i64, tpu.core_type = #tpu.core_type<tc>, window_params = [{pipeline_mode = #tpu.pipeline_mode<synchronous>, transform_indices = @transform_0, window_bounds = array<i64: 16, 160>}, {transform_indices = @transform_1, window_bounds = array<i64: 160, 128>}, {pipeline_mode = #tpu.pipeline_mode<synchronous>, transform_indices = @transform_2, window_bounds = array<i64: 16, 1>}, {transform_indices = @transform_3, window_bounds = array<i64: 16, 128>}]} {
    %c0 = arith.constant 0 : index
    %c0_0 = arith.constant 0 : index
    %0 = vector.load %arg1[%c0, %c0_0] : memref<16x160xbf16, #tpu.memory_space<vmem>>, vector<16x160xbf16>
    %c0_1 = arith.constant 0 : index
    %c0_2 = arith.constant 0 : index
    %1 = vector.load %arg2[%c0_1, %c0_2] : memref<160x128xbf16, #tpu.memory_space<vmem>>, vector<160x128xbf16>
    %cst = arith.constant dense<0.000000e+00> : vector<16x128xf32>
    %2 = tpu.matmul %0, %1, %cst {dimension_numbers = #tpu.dot_dimension_numbers<[1], [0], [0], [1], [0, 0, 1, 1], [], []>} : vector<16x160xbf16>, vector<160x128xbf16>, vector<16x128xf32> -> vector<16x128xf32>
    %c0_3 = arith.constant 0 : index
    %c0_4 = arith.constant 0 : index
    %3 = vector.load %arg3[%c0_3, %c0_4] : memref<16x1xf32, #tpu.memory_space<vmem>>, vector<16x1xf32>
    %4 = vector.broadcast %3 : vector<16x1xf32> to vector<16x128xf32>
    %5 = arith.addf %2, %4 : vector<16x128xf32>
    %cst_5 = arith.constant 0.000000e+00 : f32
    %6 = vector.broadcast %cst_5 : f32 to vector<16x128xf32>
    %7 = arith.maximumf %5, %6 : vector<16x128xf32>
    %8 = arith.truncf %7 : vector<16x128xf32> to vector<16x128xbf16>
    %c0_6 = arith.constant 0 : index
    %c0_7 = arith.constant 0 : index
    %9 = vector.load %arg4[%c0_6, %c0_7] : memref<16x128xbf16, #tpu.memory_space<vmem>>, vector<16x128xbf16>
    tpu.vector_store %arg4[%c0_6, %c0_7], %8 {strides = array<i32>} : memref<16x128xbf16, #tpu.memory_space<vmem>>, vector<16x128xbf16>,
    return
  }
  func.func @transform_0(%arg0: i32) -> (i32, i32) {
    %c0_i32 = arith.constant 0 : i32
    %c0_i32_0 = arith.constant 0 : i32
    %c0_i32_1 = arith.constant 0 : i32
    return %c0_i32, %c0_i32_0 : i32, i32
  }
  func.func @transform_1(%arg0: i32) -> (i32, i32) {
    %c0_i32 = arith.constant 0 : i32
    %c0_i32_0 = arith.constant 0 : i32
    return %c0_i32, %arg0 : i32, i32
  }
  func.func @transform_2(%arg0: i32) -> (i32, i32) {
    %c0_i32 = arith.constant 0 : i32
    %c0_i32_0 = arith.constant 0 : i32
    %c0_i32_1 = arith.constant 0 : i32
    return %c0_i32, %c0_i32_0 : i32, i32
  }
  func.func @transform_3(%arg0: i32) -> (i32, i32) {
    %c0_i32 = arith.constant 0 : i32
    %c0_i32_0 = arith.constant 0 : i32
    return %c0_i32, %arg0 : i32, i32
  }
}

module attributes {stable_mosaic.version = 11 : i64} {
  func.func @_fc_fused_kernel(%arg0: i32, %arg1: memref<8x400xbf16, #tpu.memory_space<vmem>>, %arg2: memref<400x128xbf16, #tpu.memory_space<vmem>>, %arg3: memref<1x128xf32, #tpu.memory_space<vmem>>, %arg4: memref<128x128xbf16, #tpu.memory_space<vmem>>, %arg5: memref<1x128xf32, #tpu.memory_space<vmem>>, %arg6: memref<128x128xbf16, #tpu.memory_space<vmem>>, %arg7: memref<1x128xf32, #tpu.memory_space<vmem>>, %arg8: memref<8x128xf32, #tpu.memory_space<vmem>>) attributes {dimension_semantics = [#tpu.dimension_semantics<parallel>], iteration_bounds = array<i64: 1>, scalar_prefetch = 0 : i64, scratch_operands = 0 : i64, tpu.core_type = #tpu.core_type<tc>, window_params = [{transform_indices = @transform_0, window_bounds = array<i64: 8, 400>}, {pipeline_mode = #tpu.pipeline_mode<synchronous>, transform_indices = @transform_1, window_bounds = array<i64: 400, 128>}, {pipeline_mode = #tpu.pipeline_mode<synchronous>, transform_indices = @transform_2, window_bounds = array<i64: 1, 128>}, {pipeline_mode = #tpu.pipeline_mode<synchronous>, transform_indices = @transform_3, window_bounds = array<i64: 128, 128>}, {pipeline_mode = #tpu.pipeline_mode<synchronous>, transform_indices = @transform_4, window_bounds = array<i64: 1, 128>}, {pipeline_mode = #tpu.pipeline_mode<synchronous>, transform_indices = @transform_5, window_bounds = array<i64: 128, 128>}, {pipeline_mode = #tpu.pipeline_mode<synchronous>, transform_indices = @transform_6, window_bounds = array<i64: 1, 128>}, {transform_indices = @transform_7, window_bounds = array<i64: 8, 128>}]} {
    %c0 = arith.constant 0 : index
    %c0_0 = arith.constant 0 : index
    %0 = vector.load %arg1[%c0, %c0_0] : memref<8x400xbf16, #tpu.memory_space<vmem>>, vector<8x400xbf16>
    %c0_1 = arith.constant 0 : index
    %c0_2 = arith.constant 0 : index
    %1 = vector.load %arg2[%c0_1, %c0_2] : memref<400x128xbf16, #tpu.memory_space<vmem>>, vector<400x128xbf16>
    %cst = arith.constant dense<0.000000e+00> : vector<8x128xf32>
    %2 = tpu.matmul %0, %1, %cst {dimension_numbers = #tpu.dot_dimension_numbers<[1], [0], [0], [1], [0, 0, 1, 1], [], []>} : vector<8x400xbf16>, vector<400x128xbf16>, vector<8x128xf32> -> vector<8x128xf32>
    %c0_3 = arith.constant 0 : index
    %c0_4 = arith.constant 0 : index
    %3 = vector.load %arg3[%c0_3, %c0_4] : memref<1x128xf32, #tpu.memory_space<vmem>>, vector<1x128xf32>
    %4 = vector.broadcast %3 : vector<1x128xf32> to vector<8x128xf32>
    %5 = arith.addf %2, %4 : vector<8x128xf32>
    %cst_5 = arith.constant 0.000000e+00 : f32
    %6 = vector.broadcast %cst_5 : f32 to vector<8x128xf32>
    %7 = arith.maximumf %5, %6 : vector<8x128xf32>
    %8 = arith.truncf %7 : vector<8x128xf32> to vector<8x128xbf16>
    %c0_6 = arith.constant 0 : index
    %c0_7 = arith.constant 0 : index
    %9 = vector.load %arg4[%c0_6, %c0_7] : memref<128x128xbf16, #tpu.memory_space<vmem>>, vector<128x128xbf16>
    %cst_8 = arith.constant dense<0.000000e+00> : vector<8x128xf32>
    %10 = tpu.matmul %8, %9, %cst_8 {dimension_numbers = #tpu.dot_dimension_numbers<[1], [0], [0], [1], [0, 0, 1, 1], [], []>} : vector<8x128xbf16>, vector<128x128xbf16>, vector<8x128xf32> -> vector<8x128xf32>
    %c0_9 = arith.constant 0 : index
    %c0_10 = arith.constant 0 : index
    %11 = vector.load %arg5[%c0_9, %c0_10] : memref<1x128xf32, #tpu.memory_space<vmem>>, vector<1x128xf32>
    %12 = vector.broadcast %11 : vector<1x128xf32> to vector<8x128xf32>
    %13 = arith.addf %10, %12 : vector<8x128xf32>
    %cst_11 = arith.constant 0.000000e+00 : f32
    %14 = vector.broadcast %cst_11 : f32 to vector<8x128xf32>
    %15 = arith.maximumf %13, %14 : vector<8x128xf32>
    %16 = arith.truncf %15 : vector<8x128xf32> to vector<8x128xbf16>
    %c0_12 = arith.constant 0 : index
    %c0_13 = arith.constant 0 : index
    %17 = vector.load %arg6[%c0_12, %c0_13] : memref<128x128xbf16, #tpu.memory_space<vmem>>, vector<128x128xbf16>
    %cst_14 = arith.constant dense<0.000000e+00> : vector<8x128xf32>
    %18 = tpu.matmul %16, %17, %cst_14 {dimension_numbers = #tpu.dot_dimension_numbers<[1], [0], [0], [1], [0, 0, 1, 1], [], []>} : vector<8x128xbf16>, vector<128x128xbf16>, vector<8x128xf32> -> vector<8x128xf32>
    %c0_15 = arith.constant 0 : index
    %c0_16 = arith.constant 0 : index
    %19 = vector.load %arg7[%c0_15, %c0_16] : memref<1x128xf32, #tpu.memory_space<vmem>>, vector<1x128xf32>
    %20 = vector.broadcast %19 : vector<1x128xf32> to vector<8x128xf32>
    %21 = arith.addf %18, %20 : vector<8x128xf32>
    %c0_17 = arith.constant 0 : index
    %c0_18 = arith.constant 0 : index
    %22 = vector.load %arg8[%c0_17, %c0_18] : memref<8x128xf32, #tpu.memory_space<vmem>>, vector<8x128xf32>
    tpu.vector_store %arg8[%c0_17, %c0_18], %21 {strides = array<i32>} : memref<8x128xf32, #tpu.memory_space<vmem>>, vector<8x128xf32>,
    return
  }
  func.func @transform_0(%arg0: i32) -> (i32, i32) {
    %c0_i32 = arith.constant 0 : i32
    %c0_i32_0 = arith.constant 0 : i32
    return %arg0, %c0_i32 : i32, i32
  }
  func.func @transform_1(%arg0: i32) -> (i32, i32) {
    %c0_i32 = arith.constant 0 : i32
    %c0_i32_0 = arith.constant 0 : i32
    %c0_i32_1 = arith.constant 0 : i32
    return %c0_i32, %c0_i32_0 : i32, i32
  }
  func.func @transform_2(%arg0: i32) -> (i32, i32) {
    %c0_i32 = arith.constant 0 : i32
    %c0_i32_0 = arith.constant 0 : i32
    %c0_i32_1 = arith.constant 0 : i32
    return %c0_i32, %c0_i32_0 : i32, i32
  }
  func.func @transform_3(%arg0: i32) -> (i32, i32) {
    %c0_i32 = arith.constant 0 : i32
    %c0_i32_0 = arith.constant 0 : i32
    %c0_i32_1 = arith.constant 0 : i32
    return %c0_i32, %c0_i32_0 : i32, i32
  }
  func.func @transform_4(%arg0: i32) -> (i32, i32) {
    %c0_i32 = arith.constant 0 : i32
    %c0_i32_0 = arith.constant 0 : i32
    %c0_i32_1 = arith.constant 0 : i32
    return %c0_i32, %c0_i32_0 : i32, i32
  }
  func.func @transform_5(%arg0: i32) -> (i32, i32) {
    %c0_i32 = arith.constant 0 : i32
    %c0_i32_0 = arith.constant 0 : i32
    %c0_i32_1 = arith.constant 0 : i32
    return %c0_i32, %c0_i32_0 : i32, i32
  }
  func.func @transform_6(%arg0: i32) -> (i32, i32) {
    %c0_i32 = arith.constant 0 : i32
    %c0_i32_0 = arith.constant 0 : i32
    %c0_i32_1 = arith.constant 0 : i32
    return %c0_i32, %c0_i32_0 : i32, i32
  }
  func.func @transform_7(%arg0: i32) -> (i32, i32) {
    %c0_i32 = arith.constant 0 : i32
    %c0_i32_0 = arith.constant 0 : i32
    return %arg0, %c0_i32 : i32, i32
  }
}

</mosaic_0001>

<llo_original>
// kernel: squeeze.176
$region0: #{squeeze.176}
  %s0 = inlined_call_operand.vmem [shape: bf16[1,2,28,28], index: 0, kind: input, shape index: {}]
  %s1 = inlined_call_operand.vmem [shape: bf16[1,1568], index: 1, kind: output, shape index: {}]
  $region1: #{squeeze.176} parent=0
    #allocation0 [shape = 'u8[53248]{0}', space=vmem, size = 0xd000, scoped, tag = 'scoped mem for output reshape']
    #allocation1 [shape = 'u8[32768]{0}', space=vmem, size = 0x8000, scoped, tag = 'scoped mem for input reshape']
    %s3 = smul.u32 4, 2
    %s4 = sshllo.u32 0, %s3
    %s5 = smul.addr 4, 7
    %s6 = scalar_lea.vmem %s0, %s5
    %s7 = sshrl.u32 %s4, 1
    %s8 = sor.u32 %s4, %s7
    %s9 = sand.u32 %s8, 85
    %s10 = sshrl.u32 %s9, 1
    %s11 = sor.u32 %s9, %s10
    %s12 = sand.u32 51, %s11
    %s13 = sshrl.u32 %s12, 2
    %s14 = sor.u32 %s12, %s13
    %s15 = sand.u32 15, %s14
    %v16 = vld [vmem:[%s6] sm:%s15]
    %v17 = vunpack.c.l.bf16 %v16
    %v18 = vunpack.c.h.bf16 %v16
    %s19 = scalar_lea.vmem [#allocation1], 56
    %20 = vst [vmem:[%s19] sm:%s4] %v17
    %s21 = smul.addr 4, 6
    %s22 = scalar_lea.vmem %s0, %s21
    %s23 = sshrl.u32 %s4, 1
    %s24 = sor.u32 %s4, %s23
    %s25 = sand.u32 %s24, 85
    %s26 = sshrl.u32 %s25, 1
    %s27 = sor.u32 %s25, %s26
    %s28 = sand.u32 51, %s27
    %s29 = sshrl.u32 %s28, 2
    %s30 = sor.u32 %s28, %s29
    %s31 = sand.u32 15, %s30
    %v32 = vld [vmem:[%s22] sm:%s31]
    %v33 = vunpack.c.l.bf16 %v32
    %v34 = vunpack.c.h.bf16 %v32
    %s35 = scalar_lea.vmem [#allocation1], 48
    %36 = vst [vmem:[%s35] sm:%s4] %v33
    %s37 = smul.addr 4, 5
    %s38 = scalar_lea.vmem %s0, %s37
    %s39 = sshrl.u32 %s4, 1
    %s40 = sor.u32 %s4, %s39
    %s41 = sand.u32 %s40, 85
    %s42 = sshrl.u32 %s41, 1
    %s43 = sor.u32 %s41, %s42
    %s44 = sand.u32 51, %s43
    %s45 = sshrl.u32 %s44, 2
    %s46 = sor.u32 %s44, %s45
    %s47 = sand.u32 15, %s46
    %v48 = vld [vmem:[%s38] sm:%s47]
    %v49 = vunpack.c.l.bf16 %v48
    %v50 = vunpack.c.h.bf16 %v48
    %s51 = scalar_lea.vmem [#allocation1], 40
    %52 = vst [vmem:[%s51] sm:%s4] %v49
    %s53 = smul.addr 4, 4
    %s54 = scalar_lea.vmem %s0, %s53
    %s55 = sshrl.u32 %s4, 1
    %s56 = sor.u32 %s4, %s55
    %s57 = sand.u32 %s56, 85
    %s58 = sshrl.u32 %s57, 1
    %s59 = sor.u32 %s57, %s58
    %s60 = sand.u32 51, %s59
    %s61 = sshrl.u32 %s60, 2
    %s62 = sor.u32 %s60, %s61
    %s63 = sand.u32 15, %s62
    %v64 = vld [vmem:[%s54] sm:%s63]
    %v65 = vunpack.c.l.bf16 %v64
    %v66 = vunpack.c.h.bf16 %v64
    %s67 = scalar_lea.vmem [#allocation1], 32
    %68 = vst [vmem:[%s67] sm:%s4] %v65
    %s69 = smul.addr 4, 3
    %s70 = scalar_lea.vmem %s0, %s69
    %s71 = sshrl.u32 %s4, 1
    %s72 = sor.u32 %s4, %s71
    %s73 = sand.u32 %s72, 85
    %s74 = sshrl.u32 %s73, 1
    %s75 = sor.u32 %s73, %s74
    %s76 = sand.u32 51, %s75
    %s77 = sshrl.u32 %s76, 2
    %s78 = sor.u32 %s76, %s77
    %s79 = sand.u32 15, %s78
    %v80 = vld [vmem:[%s70] sm:%s79]
    %v81 = vunpack.c.l.bf16 %v80
    %v82 = vunpack.c.h.bf16 %v80
    %s83 = scalar_lea.vmem [#allocation1], 24
    %84 = vst [vmem:[%s83] sm:%s4] %v81
    %s85 = smul.addr 4, 2
    %s86 = scalar_lea.vmem %s0, %s85
    %s87 = sshrl.u32 %s4, 1
    %s88 = sor.u32 %s4, %s87
    %s89 = sand.u32 %s88, 85
    %s90 = sshrl.u32 %s89, 1
    %s91 = sor.u32 %s89, %s90
    %s92 = sand.u32 51, %s91
    %s93 = sshrl.u32 %s92, 2
    %s94 = sor.u32 %s92, %s93
    %s95 = sand.u32 15, %s94
    %v96 = vld [vmem:[%s86] sm:%s95]
    %v97 = vunpack.c.l.bf16 %v96
    %v98 = vunpack.c.h.bf16 %v96
    %s99 = scalar_lea.vmem [#allocation1], 16
    %100 = vst [vmem:[%s99] sm:%s4] %v97
    %s101 = scalar_lea.vmem %s0, 4
    %s102 = sshrl.u32 %s4, 1
    %s103 = sor.u32 %s4, %s102
    %s104 = sand.u32 %s103, 85
    %s105 = sshrl.u32 %s104, 1
    %s106 = sor.u32 %s104, %s105
    %s107 = sand.u32 51, %s106
    %s108 = sshrl.u32 %s107, 2
    %s109 = sor.u32 %s107, %s108
    %s110 = sand.u32 15, %s109
    %v111 = vld [vmem:[%s101] sm:%s110]
    %v112 = vunpack.c.l.bf16 %v111
    %v113 = vunpack.c.h.bf16 %v111
    %s114 = scalar_lea.vmem [#allocation1], 8
    %115 = vst [vmem:[%s114] sm:%s4] %v112
    %s116 = sshrl.u32 %s4, 1
    %s117 = sor.u32 %s4, %s116
    %s118 = sand.u32 %s117, 85
    %s119 = sshrl.u32 %s118, 1
    %s120 = sor.u32 %s118, %s119
    %s121 = sand.u32 51, %s120
    %s122 = sshrl.u32 %s121, 2
    %s123 = sor.u32 %s121, %s122
    %s124 = sand.u32 15, %s123
    %v125 = vld [vmem:[%s0] sm:%s124]
    %v126 = vunpack.c.l.bf16 %v125
    %v127 = vunpack.c.h.bf16 %v125
    %128 = vst [vmem:[#allocation1] sm:%s4] %v126
    %s129 = smov 3
    %v130 = vld [vmem:[#allocation1] ss:$36 sm:%s129]
    %vm131 = vcmask 228352
    %132 = vst.msk [vmem:[#allocation0] ss:$56 sm:$0x3] %vm131, %v130
    %s133 = scalar_lea.vmem [#allocation1], 45
    %s134 = smov 3
    %v135 = vld [vmem:[%s133] ss:$-36 sm:%s134]
    %s136 = scalar_lea.vmem [#allocation1], 45
    %s137 = smov 3
    %v138 = vld [vmem:[%s136] ss:$-36 sm:%s137]
    %vm139 = vcmask 31744
    %v140 = vsel %vm139, %v138, %v135
    %141 = vrot.lane.b32.xlu0 %v140, 124
    %v142 = vpop.permute.xlu0 %141
    %vm143 = vcmask 195584
    %s144 = scalar_lea.vmem [#allocation0], 72
    %145 = vst.msk [vmem:[%s144] ss:$-56 sm:$0x3] %vm143, %v142
    %vm146 = vcmask 1048544
    %s147 = scalar_lea.vmem [#allocation0], 64
    %148 = vst.msk [vmem:[%s147] ss:$-56 sm:$0x3] %vm146, %v142
    %s149 = scalar_lea.vmem [#allocation1], 18
    %s150 = smov 3
    %v151 = vld [vmem:[%s149] ss:$36 sm:%s150]
    %s152 = scalar_lea.vmem [#allocation1], 54
    %s153 = smov 3
    %v154 = vld [vmem:[%s152] ss:$-36 sm:%s153]
    %vm155 = vcmask 64512
    %v156 = vsel %vm155, %v154, %v151
    %157 = vrot.lane.b32.xlu0 %v156, 120
    %v158 = vpop.permute.xlu0 %157
    %vm159 = vcmask 162816
    %s160 = scalar_lea.vmem [#allocation0], 32
    %161 = vst.msk [vmem:[%s160] ss:$56 sm:$0x3] %vm159, %v158
    %vm162 = vcmask 1048512
    %s163 = scalar_lea.vmem [#allocation0], 80
    %164 = vst.msk [vmem:[%s163] ss:$-56 sm:$0x3] %vm162, %v158
    %s165 = scalar_lea.vmem [#allocation1], 27
    %v166 = vld [vmem:[%s165] sm:$0x1]
    %s167 = scalar_lea.vmem [#allocation1], 27
    %v168 = vld [vmem:[%s167] sm:$0x1]
    %vm169 = vcmask 97280
    %v170 = vsel %vm169, %v168, %v166
    %171 = vrot.lane.b32.xlu0 %v170, 116
    %v172 = vpop.permute.xlu0 %171
    %vm173 = vcmask 130048
    %s174 = scalar_lea.vmem [#allocation0], 48
    %175 = vst.msk [vmem:[%s174] sm:$0x1] %vm173, %v172
    %vm176 = vcmask 1048480
    %s177 = scalar_lea.vmem [#allocation0], 40
    %178 = vst.msk [vmem:[%s177] sm:$0x1] %vm176, %v172
    %s179 = scalar_lea.vmem [#allocation1], 40
    %s180 = smov 3
    %v181 = vld [vmem:[%s179] ss:$-36 sm:%s180]
    %s182 = scalar_lea.vmem [#allocation1], 4
    %s183 = smov 3
    %v184 = vld [vmem:[%s182] ss:$36 sm:%s183]
    %vm185 = vcmask 130048
    %v186 = vsel %vm185, %v184, %v181
    %187 = vrot.lane.b32.xlu0 %v186, 112
    %v188 = vpop.permute.xlu0 %187
    %vm189 = vcmask 97280
    %s190 = scalar_lea.vmem [#allocation0], 64
    %191 = vst.msk [vmem:[%s190] ss:$-56 sm:$0x3] %vm189, %v188
    %vm192 = vcmask 1048448
    %193 = vst.msk [vmem:[#allocation0] ss:$56 sm:$0x3] %vm192, %v188
    %s194 = scalar_lea.vmem [#allocation1], 49
    %s195 = smov 3
    %v196 = vld [vmem:[%s194] ss:$-36 sm:%s195]
    %s197 = scalar_lea.vmem [#allocation1], 49
    %s198 = smov 3
    %v199 = vld [vmem:[%s197] ss:$-36 sm:%s198]
    %vm200 = vcmask 162816
    %v201 = vsel %vm200, %v199, %v196
    %202 = vrot.lane.b32.xlu0 %v201, 108
    %v203 = vpop.permute.xlu0 %202
    %vm204 = vcmask 64512
    %s205 = scalar_lea.vmem [#allocation0], 80
    %206 = vst.msk [vmem:[%s205] ss:$-56 sm:$0x3] %vm204, %v203
    %vm207 = vcmask 1048416
    %s208 = scalar_lea.vmem [#allocation0], 72
    %209 = vst.msk [vmem:[%s208] ss:$-56 sm:$0x3] %vm207, %v203
    %s210 = scalar_lea.vmem [#allocation1], 58
    %s211 = smov 3
    %v212 = vld [vmem:[%s210] ss:$-36 sm:%s211]
    %s213 = scalar_lea.vmem [#allocation1], 22
    %s214 = smov 3
    %v215 = vld [vmem:[%s213] ss:$36 sm:%s214]
    %vm216 = vcmask 195584
    %v217 = vsel %vm216, %v215, %v212
    %218 = vrot.lane.b32.xlu0 %v217, 104
    %v219 = vpop.permute.xlu0 %218
    %vm220 = vcmask 31744
    %s221 = scalar_lea.vmem [#allocation0], 96
    %222 = vst.msk [vmem:[%s221] ss:$-56 sm:$0x3] %vm220, %v219
    %vm223 = vcmask 1048384
    %s224 = scalar_lea.vmem [#allocation0], 32
    %225 = vst.msk [vmem:[%s224] ss:$56 sm:$0x3] %vm223, %v219
    %s226 = scalar_lea.vmem [#allocation1], 35
    %v227 = vld [vmem:[%s226] sm:$0x1]
    %228 = vrot.lane.b32.xlu0 %v227, 100
    %v229 = vpop.permute.xlu0 %228
    %vm230 = vcmask 1048352
    %s231 = scalar_lea.vmem [#allocation0], 48
    %232 = vst.msk [vmem:[%s231] sm:$0x1] %vm230, %v229
    %s233 = scalar_lea.vmem [#allocation1], 44
    %s234 = smov 3
    %v235 = vld [vmem:[%s233] ss:$-36 sm:%s234]
    %236 = vrot.lane.b32.xlu0 %v235, 96
    %v237 = vpop.permute.xlu0 %236
    %vm238 = vcmask 1015552
    %s239 = scalar_lea.vmem [#allocation0], 64
    %240 = vst.msk [vmem:[%s239] ss:$-56 sm:$0x3] %vm238, %v237
    %s241 = scalar_lea.vmem [#allocation1], 53
    %s242 = smov 3
    %v243 = vld [vmem:[%s241] ss:$-36 sm:%s242]
    %244 = vrot.lane.b32.xlu0 %v243, 92
    %v245 = vpop.permute.xlu0 %244
    %vm246 = vcmask 982752
    %s247 = scalar_lea.vmem [#allocation0], 80
    %248 = vst.msk [vmem:[%s247] ss:$-56 sm:$0x3] %vm246, %v245
    %s249 = scalar_lea.vmem [#allocation1], 26
    %v250 = vld [vmem:[%s249] sm:$0x1]
    %251 = vrot.lane.b32.xlu0 %v250, 88
    %v252 = vpop.permute.xlu0 %251
    %vm253 = vcmask 949952
    %s254 = scalar_lea.vmem [#allocation0], 40
    %255 = vst.msk [vmem:[%s254] sm:$0x1] %vm253, %v252
    %s256 = scalar_lea.vmem [#allocation1], 3
    %s257 = smov 3
    %v258 = vld [vmem:[%s256] ss:$36 sm:%s257]
    %259 = vrot.lane.b32.xlu0 %v258, 84
    %v260 = vpop.permute.xlu0 %259
    %vm261 = vcmask 917152
    %262 = vst.msk [vmem:[#allocation0] ss:$56 sm:$0x3] %vm261, %v260
    %s263 = scalar_lea.vmem [#allocation1], 48
    %s264 = smov 3
    %v265 = vld [vmem:[%s263] ss:$-36 sm:%s264]
    %266 = vrot.lane.b32.xlu0 %v265, 80
    %v267 = vpop.permute.xlu0 %266
    %vm268 = vcmask 884352
    %s269 = scalar_lea.vmem [#allocation0], 72
    %270 = vst.msk [vmem:[%s269] ss:$-56 sm:$0x3] %vm268, %v267
    %s271 = scalar_lea.vmem [#allocation1], 21
    %s272 = smov 3
    %v273 = vld [vmem:[%s271] ss:$36 sm:%s272]
    %274 = vrot.lane.b32.xlu0 %v273, 76
    %v275 = vpop.permute.xlu0 %274
    %vm276 = vcmask 851552
    %s277 = scalar_lea.vmem [#allocation0], 32
    %278 = vst.msk [vmem:[%s277] ss:$56 sm:$0x3] %vm276, %v275
    %s279 = scalar_lea.vmem [#allocation1], 34
    %v280 = vld [vmem:[%s279] sm:$0x1]
    %281 = vrot.lane.b32.xlu0 %v280, 72
    %v282 = vpop.permute.xlu0 %281
    %vm283 = vcmask 818752
    %s284 = scalar_lea.vmem [#allocation0], 48
    %285 = vst.msk [vmem:[%s284] sm:$0x1] %vm283, %v282
    %s286 = scalar_lea.vmem [#allocation1], 43
    %s287 = smov 3
    %v288 = vld [vmem:[%s286] ss:$-36 sm:%s287]
    %289 = vrot.lane.b32.xlu0 %v288, 68
    %v290 = vpop.permute.xlu0 %289
    %vm291 = vcmask 785952
    %s292 = scalar_lea.vmem [#allocation0], 64
    %293 = vst.msk [vmem:[%s292] ss:$-56 sm:$0x3] %vm291, %v290
    %s294 = scalar_lea.vmem [#allocation1], 52
    %s295 = smov 3
    %v296 = vld [vmem:[%s294] ss:$-36 sm:%s295]
    %297 = vrot.lane.b32.xlu0 %v296, 64
    %v298 = vpop.permute.xlu0 %297
    %vm299 = vcmask 753152
    %s300 = scalar_lea.vmem [#allocation0], 80
    %301 = vst.msk [vmem:[%s300] ss:$-56 sm:$0x3] %vm299, %v298
    %s302 = scalar_lea.vmem [#allocation1], 25
    %v303 = vld [vmem:[%s302] sm:$0x1]
    %304 = vrot.lane.b32.xlu0 %v303, 60
    %v305 = vpop.permute.xlu0 %304
    %vm306 = vcmask 720352
    %s307 = scalar_lea.vmem [#allocation0], 40
    %308 = vst.msk [vmem:[%s307] sm:$0x1] %vm306, %v305
    %s309 = scalar_lea.vmem [#allocation1], 2
    %s310 = smov 3
    %v311 = vld [vmem:[%s309] ss:$36 sm:%s310]
    %312 = vrot.lane.b32.xlu0 %v311, 56
    %v313 = vpop.permute.xlu0 %312
    %vm314 = vcmask 687552
    %315 = vst.msk [vmem:[#allocation0] ss:$56 sm:$0x3] %vm314, %v313
    %s316 = scalar_lea.vmem [#allocation1], 47
    %s317 = smov 3
    %v318 = vld [vmem:[%s316] ss:$-36 sm:%s317]
    %319 = vrot.lane.b32.xlu0 %v318, 52
    %v320 = vpop.permute.xlu0 %319
    %vm321 = vcmask 654752
    %s322 = scalar_lea.vmem [#allocation0], 72
    %323 = vst.msk [vmem:[%s322] ss:$-56 sm:$0x3] %vm321, %v320
    %s324 = scalar_lea.vmem [#allocation1], 20
    %s325 = smov 3
    %v326 = vld [vmem:[%s324] ss:$36 sm:%s325]
    %327 = vrot.lane.b32.xlu0 %v326, 48
    %v328 = vpop.permute.xlu0 %327
    %vm329 = vcmask 621952
    %s330 = scalar_lea.vmem [#allocation0], 32
    %331 = vst.msk [vmem:[%s330] ss:$56 sm:$0x3] %vm329, %v328
    %s332 = scalar_lea.vmem [#allocation1], 33
    %v333 = vld [vmem:[%s332] sm:$0x1]
    %334 = vrot.lane.b32.xlu0 %v333, 44
    %v335 = vpop.permute.xlu0 %334
    %vm336 = vcmask 589152
    %s337 = scalar_lea.vmem [#allocation0], 48
    %338 = vst.msk [vmem:[%s337] sm:$0x1] %vm336, %v335
    %s339 = scalar_lea.vmem [#allocation1], 42
    %s340 = smov 3
    %v341 = vld [vmem:[%s339] ss:$-36 sm:%s340]
    %342 = vrot.lane.b32.xlu0 %v341, 40
    %v343 = vpop.permute.xlu0 %342
    %vm344 = vcmask 556352
    %s345 = scalar_lea.vmem [#allocation0], 64
    %346 = vst.msk [vmem:[%s345] ss:$-56 sm:$0x3] %vm344, %v343
    %s347 = scalar_lea.vmem [#allocation1], 51
    %s348 = smov 3
    %v349 = vld [vmem:[%s347] ss:$-36 sm:%s348]
    %350 = vrot.lane.b32.xlu0 %v349, 36
    %v351 = vpop.permute.xlu0 %350
    %vm352 = vcmask 523552
    %s353 = scalar_lea.vmem [#allocation0], 80
    %354 = vst.msk [vmem:[%s353] ss:$-56 sm:$0x3] %vm352, %v351
    %s355 = scalar_lea.vmem [#allocation1], 24
    %v356 = vld [vmem:[%s355] sm:$0x1]
    %357 = vrot.lane.b32.xlu0 %v356, 32
    %v358 = vpop.permute.xlu0 %357
    %vm359 = vcmask 490752
    %s360 = scalar_lea.vmem [#allocation0], 40
    %361 = vst.msk [vmem:[%s360] sm:$0x1] %vm359, %v358
    %s362 = scalar_lea.vmem [#allocation1], 1
    %s363 = smov 3
    %v364 = vld [vmem:[%s362] ss:$36 sm:%s363]
    %365 = vrot.lane.b32.xlu0 %v364, 28
    %v366 = vpop.permute.xlu0 %365
    %vm367 = vcmask 457952
    %368 = vst.msk [vmem:[#allocation0] ss:$56 sm:$0x3] %vm367, %v366
    %s369 = scalar_lea.vmem [#allocation1], 46
    %s370 = smov 3
    %v371 = vld [vmem:[%s369] ss:$-36 sm:%s370]
    %372 = vrot.lane.b32.xlu0 %v371, 24
    %v373 = vpop.permute.xlu0 %372
    %vm374 = vcmask 425152
    %s375 = scalar_lea.vmem [#allocation0], 72
    %376 = vst.msk [vmem:[%s375] ss:$-56 sm:$0x3] %vm374, %v373
    %s377 = scalar_lea.vmem [#allocation1], 19
    %s378 = smov 3
    %v379 = vld [vmem:[%s377] ss:$36 sm:%s378]
    %380 = vrot.lane.b32.xlu0 %v379, 20
    %v381 = vpop.permute.xlu0 %380
    %vm382 = vcmask 392352
    %s383 = scalar_lea.vmem [#allocation0], 32
    %384 = vst.msk [vmem:[%s383] ss:$56 sm:$0x3] %vm382, %v381
    %s385 = scalar_lea.vmem [#allocation1], 32
    %v386 = vld [vmem:[%s385] sm:$0x1]
    %387 = vrot.lane.b32.xlu0 %v386, 16
    %v388 = vpop.permute.xlu0 %387
    %vm389 = vcmask 359552
    %s390 = scalar_lea.vmem [#allocation0], 48
    %391 = vst.msk [vmem:[%s390] sm:$0x1] %vm389, %v388
    %s392 = scalar_lea.vmem [#allocation1], 41
    %s393 = smov 3
    %v394 = vld [vmem:[%s392] ss:$-36 sm:%s393]
    %395 = vrot.lane.b32.xlu0 %v394, 12
    %v396 = vpop.permute.xlu0 %395
    %vm397 = vcmask 326752
    %s398 = scalar_lea.vmem [#allocation0], 64
    %399 = vst.msk [vmem:[%s398] ss:$-56 sm:$0x3] %vm397, %v396
    %s400 = scalar_lea.vmem [#allocation1], 50
    %s401 = smov 3
    %v402 = vld [vmem:[%s400] ss:$-36 sm:%s401]
    %403 = vrot.lane.b32.xlu0 %v402, 8
    %v404 = vpop.permute.xlu0 %403
    %vm405 = vcmask 293952
    %s406 = scalar_lea.vmem [#allocation0], 80
    %407 = vst.msk [vmem:[%s406] ss:$-56 sm:$0x3] %vm405, %v404
    %s408 = scalar_lea.vmem [#allocation1], 59
    %s409 = smov 3
    %v410 = vld [vmem:[%s408] ss:$-36 sm:%s409]
    %411 = vrot.lane.b32.xlu0 %v410, 4
    %v412 = vpop.permute.xlu0 %411
    %vm413 = vcmask 261152
    %s414 = scalar_lea.vmem [#allocation0], 96
    %415 = vst.msk [vmem:[%s414] ss:$-56 sm:$0x3] %vm413, %v412
    %s417 = smul.u32 1, 2
    %s418 = sshllo.u32 0, %s417
    %s419 = sshrl.u32 %s417, 1
    %v420 = vld [vmem:[#allocation0] sm:%s418]
    %v421 = vpack.c.bf16 0.0, %v420
    %s422 = sshllo.u32 0, %s419
    %423 = vst [vmem:[%s1] sm:%s422] %v421
    %s424 = scalar_lea.vmem [#allocation0], 8
    %v425 = vld [vmem:[%s424] sm:%s418]
    %v426 = vpack.c.bf16 0.0, %v425
    %s427 = sshllo.u32 0, %s419
    %s428 = scalar_lea.vmem %s1, 1
    %429 = vst [vmem:[%s428] sm:%s427] %v426
    %s430 = scalar_lea.vmem [#allocation0], 16
    %v431 = vld [vmem:[%s430] sm:%s418]
    %v432 = vpack.c.bf16 0.0, %v431
    %s433 = sshllo.u32 0, %s419
    %s434 = smul.addr 1, 2
    %s435 = scalar_lea.vmem %s1, %s434
    %436 = vst [vmem:[%s435] sm:%s433] %v432
    %s437 = scalar_lea.vmem [#allocation0], 24
    %v438 = vld [vmem:[%s437] sm:%s418]
    %v439 = vpack.c.bf16 0.0, %v438
    %s440 = sshllo.u32 0, %s419
    %s441 = smul.addr 1, 3
    %s442 = scalar_lea.vmem %s1, %s441
    %443 = vst [vmem:[%s442] sm:%s440] %v439
    %s444 = scalar_lea.vmem [#allocation0], 32
    %v445 = vld [vmem:[%s444] sm:%s418]
    %v446 = vpack.c.bf16 0.0, %v445
    %s447 = sshllo.u32 0, %s419
    %s448 = smul.addr 1, 4
    %s449 = scalar_lea.vmem %s1, %s448
    %450 = vst [vmem:[%s449] sm:%s447] %v446
    %s451 = scalar_lea.vmem [#allocation0], 40
    %v452 = vld [vmem:[%s451] sm:%s418]
    %v453 = vpack.c.bf16 0.0, %v452
    %s454 = sshllo.u32 0, %s419
    %s455 = smul.addr 1, 5
    %s456 = scalar_lea.vmem %s1, %s455
    %457 = vst [vmem:[%s456] sm:%s454] %v453
    %s458 = scalar_lea.vmem [#allocation0], 48
    %v459 = vld [vmem:[%s458] sm:%s418]
    %v460 = vpack.c.bf16 0.0, %v459
    %s461 = sshllo.u32 0, %s419
    %s462 = smul.addr 1, 6
    %s463 = scalar_lea.vmem %s1, %s462
    %464 = vst [vmem:[%s463] sm:%s461] %v460
    %s465 = scalar_lea.vmem [#allocation0], 56
    %v466 = vld [vmem:[%s465] sm:%s418]
    %v467 = vpack.c.bf16 0.0, %v466
    %s468 = sshllo.u32 0, %s419
    %s469 = smul.addr 1, 7
    %s470 = scalar_lea.vmem %s1, %s469
    %471 = vst [vmem:[%s470] sm:%s468] %v467
    %s472 = scalar_lea.vmem [#allocation0], 64
    %v473 = vld [vmem:[%s472] sm:%s418]
    %v474 = vpack.c.bf16 0.0, %v473
    %s475 = sshllo.u32 0, %s419
    %s476 = smul.addr 1, 8
    %s477 = scalar_lea.vmem %s1, %s476
    %478 = vst [vmem:[%s477] sm:%s475] %v474
    %s479 = scalar_lea.vmem [#allocation0], 72
    %v480 = vld [vmem:[%s479] sm:%s418]
    %v481 = vpack.c.bf16 0.0, %v480
    %s482 = sshllo.u32 0, %s419
    %s483 = smul.addr 1, 9
    %s484 = scalar_lea.vmem %s1, %s483
    %485 = vst [vmem:[%s484] sm:%s482] %v481
    %s486 = scalar_lea.vmem [#allocation0], 80
    %v487 = vld [vmem:[%s486] sm:%s418]
    %v488 = vpack.c.bf16 0.0, %v487
    %s489 = sshllo.u32 0, %s419
    %s490 = smul.addr 1, 10
    %s491 = scalar_lea.vmem %s1, %s490
    %492 = vst [vmem:[%s491] sm:%s489] %v488
    %s493 = scalar_lea.vmem [#allocation0], 88
    %v494 = vld [vmem:[%s493] sm:%s418]
    %v495 = vpack.c.bf16 0.0, %v494
    %s496 = sshllo.u32 0, %s419
    %s497 = smul.addr 1, 11
    %s498 = scalar_lea.vmem %s1, %s497
    %499 = vst [vmem:[%s498] sm:%s496] %v495
    %s500 = scalar_lea.vmem [#allocation0], 96
    %v501 = vld [vmem:[%s500] sm:%s418]
    %v502 = vpack.c.bf16 0.0, %v501
    %s503 = sshllo.u32 0, %s419
    %s504 = smul.addr 1, 12
    %s505 = scalar_lea.vmem %s1, %s504
    %506 = vst [vmem:[%s505] sm:%s503] %v502

// kernel: lenet_forward.3
$region0: #{lenet_forward.3}
  #allocation0 [shape = 'u32[]', space=smem, size = 0x4, offset = 0x4, fixed_abs, tag = 'smem constant byte address 0x4 - core index']
  #allocation1 [shape = 'u32[144,128]{1,0:T(1,128)}', space=vmem, size = 0x12000, scoped, tag = 'internal scratch']
  %s0 = inlined_call_operand.vmem [shape: bf16[6,32], index: 0, kind: input, shape index: {}]
  %s1 = inlined_call_operand.vmem [shape: bf16[32,1792], index: 1, kind: input, shape index: {}]
  %s2 = inlined_call_operand.vmem [shape: f32[6,1], index: 2, kind: input, shape index: {}]
  %s3 = inlined_call_operand.vmem [shape: bf16[6,1792], index: 3, kind: output, shape index: {}]
  %s4 = sld [smem:[#allocation0]]
  $region71: #{lenet_forward.3} parent=0
    _
  %s6 = ssub.s32 1, %s4
  %s7 = scalar_select 0, %s6, %s4
  $region1: #{lenet_forward.3} parent=0
    #allocation2 [shape = 'u8[114688]{0}', space=vmem, size = 0x1c000, scoped, tag = 'input window, operand 1']
    loop: start=0, step=1, limit=4
    $region2: #{lenet_forward.3} parent=1 // loop_pre_header
      _
    $region3: #{lenet_forward.3} parent=1 // loop_header
      %s9 = sphi 0, %s13
      %p10 = scmp.ge.s32.totalorder %s9, 4
      %s17 = sphi 0, %s17
      %s19 = sphi 0, %s17
      %s20 = sphi 0, %s19
      %s34 = sphi 0, %s20
      %s40 = sphi 0, %s42
      %s43 = sphi 0, %s40
      %s44 = sphi 0, %s43
      %s60 = sphi 0, %s44
      %s64 = sphi 0, %s64
      %s66 = sphi 0, %s64
      %s67 = sphi 0, %s66
      %s81 = sphi 0, %s67
      %s87 = sphi 0, %s89
      %s90 = sphi 0, %s87
      %s91 = sphi 0, %s90
      %s107 = sphi 0, %s91
    $region4: #{lenet_forward.3} parent=1 // loop_header_branch
      %12 = sbr.rel (%p10) target = $region8
    $region5: #{lenet_forward.3} parent=1 // loop_body
      %s14 = ssub.s32 %s9, 1
      %s15 = ssub.s32 %s9, 2
      %s16 = sadd.s32 %s9, 1
      %s18 = sadd.s32 %s17, 1
      %p21 = scmp.eq.s32.totalorder %s9, 1
      %p22 = scmp.ne.s32.totalorder %s17, %s19
      %p23 = scmp.eq.s32.totalorder %s9, 0
      %p24 = por %p22, %p23
      %p25 = scmp.ne.s32.totalorder %s17, %s19
      %p26 = scmp.eq.s32.totalorder %s14, 1
      %p27 = por %p25, %p26
      %p28 = scmp.ne.s32.totalorder %s19, %s20
      %p29 = scmp.eq.s32.totalorder %s14, 0
      %p30 = por %p28, %p29
      %p31 = scmp.ne.s32.totalorder %s19, %s20
      %p32 = scmp.eq.s32.totalorder %s15, 1
      %p33 = por %p31, %p32
      %p35 = scmp.ne.s32.totalorder %s20, %s34
      %p36 = scmp.eq.s32.totalorder %s15, 0
      %p37 = por %p35, %p36
      %s38 = ssub.s32 %s9, %s16
      %p39 = scmp.eq.s32.totalorder %s38, 0
      %s41 = sadd.s32 %s40, 1
      %s42 = scalar_select %p39, %s40, %s41
      %p45 = pneg %p39
      %p46 = scmp.eq.s32.totalorder %s9, 1
      %p47 = por %p45, %p46
      %p48 = scmp.ne.s32.totalorder %s40, %s43
      %p49 = scmp.eq.s32.totalorder %s9, 0
      %p50 = por %p48, %p49
      %p51 = scmp.ne.s32.totalorder %s40, %s43
      %p52 = scmp.eq.s32.totalorder %s14, 1
      %p53 = por %p51, %p52
      %p54 = scmp.ne.s32.totalorder %s43, %s44
      %p55 = scmp.eq.s32.totalorder %s14, 0
      %p56 = por %p54, %p55
      %p57 = scmp.ne.s32.totalorder %s43, %s44
      %p58 = scmp.eq.s32.totalorder %s15, 1
      %p59 = por %p57, %p58
      %p61 = scmp.ne.s32.totalorder %s44, %s60
      %p62 = scmp.eq.s32.totalorder %s15, 0
      %p63 = por %p61, %p62
      %s65 = sadd.s32 %s64, 1
      %p68 = scmp.eq.s32.totalorder %s9, 1
      %p69 = scmp.ne.s32.totalorder %s64, %s66
      %p70 = scmp.eq.s32.totalorder %s9, 0
      %p71 = por %p69, %p70
      %p72 = scmp.ne.s32.totalorder %s64, %s66
      %p73 = scmp.eq.s32.totalorder %s14, 1
      %p74 = por %p72, %p73
      %p75 = scmp.ne.s32.totalorder %s66, %s67
      %p76 = scmp.eq.s32.totalorder %s14, 0
      %p77 = por %p75, %p76
      %p78 = scmp.ne.s32.totalorder %s66, %s67
      %p79 = scmp.eq.s32.totalorder %s15, 1
      %p80 = por %p78, %p79
      %p82 = scmp.ne.s32.totalorder %s67, %s81
      %p83 = scmp.eq.s32.totalorder %s15, 0
      %p84 = por %p82, %p83
      %s85 = ssub.s32 %s9, %s16
      %p86 = scmp.eq.s32.totalorder %s85, 0
      %s88 = sadd.s32 %s87, 1
      %s89 = scalar_select %p86, %s87, %s88
      %p92 = pneg %p86
      %p93 = scmp.eq.s32.totalorder %s9, 1
      %p94 = por %p92, %p93
      %p95 = scmp.ne.s32.totalorder %s87, %s90
      %p96 = scmp.eq.s32.totalorder %s9, 0
      %p97 = por %p95, %p96
      %p98 = scmp.ne.s32.totalorder %s87, %s90
      %p99 = scmp.eq.s32.totalorder %s14, 1
      %p100 = por %p98, %p99
      %p101 = scmp.ne.s32.totalorder %s90, %s91
      %p102 = scmp.eq.s32.totalorder %s14, 0
      %p103 = por %p101, %p102
      %p104 = scmp.ne.s32.totalorder %s90, %s91
      %p105 = scmp.eq.s32.totalorder %s15, 1
      %p106 = por %p104, %p105
      %p108 = scmp.ne.s32.totalorder %s91, %s107
      %p109 = scmp.eq.s32.totalorder %s15, 0
      %p110 = por %p108, %p109
      %p111 = scmp.le.s32.totalorder 1, %s9
      %p112 = scmp.lt.s32.totalorder %s9, 3
      %p113 = pnand %p111, %p112
      %p114 = pneg %p113
      // Predicated region
      $region9: #{lenet_forward.3} parent=5 // pred_check
        _
      $region10: #{lenet_forward.3} parent=5 // pred_check_branch
        %116 = sbr.rel (%p113) target = $region12
      $region11: #{lenet_forward.3} parent=5 // pred_region
        %s117 = ssub.s32 %s9, 1
        // Predicated region
        $region13: #{lenet_forward.3} parent=11 // pred_check
          %p118 = pneg %p30
        $region14: #{lenet_forward.3} parent=11 // pred_check_branch
          %120 = sbr.rel (%p118) target = $region16
        $region15: #{lenet_forward.3} parent=11 // pred_region
          _
        $region16: #{lenet_forward.3} parent=11 // pred_fallthru
          _
        // Predicated region
        $region17: #{lenet_forward.3} parent=11 // pred_check
          %p121 = pneg %p77
        $region18: #{lenet_forward.3} parent=11 // pred_check_branch
          %123 = sbr.rel (%p121) target = $region20
        $region19: #{lenet_forward.3} parent=11 // pred_region
          _
        $region20: #{lenet_forward.3} parent=11 // pred_fallthru
          _
      $region12: #{lenet_forward.3} parent=5 // pred_fallthru
        _
      %p124 = scmp.lt.s32.totalorder %s9, 2
      // Predicated region
      $region21: #{lenet_forward.3} parent=5 // pred_check
        %p125 = pneg %p124
      $region22: #{lenet_forward.3} parent=5 // pred_check_branch
        %127 = sbr.rel (%p125) target = $region24
      $region23: #{lenet_forward.3} parent=5 // pred_region
        // Predicated region
        $region25: #{lenet_forward.3} parent=23 // pred_check
          %p128 = pneg %p50
        $region26: #{lenet_forward.3} parent=23 // pred_check_branch
          %130 = sbr.rel (%p128) target = $region28
        $region27: #{lenet_forward.3} parent=23 // pred_region
          %s131 = sand.u32 %s40, 1
          %s132 = sand.u32 %s40, 1
          %s133 = smul.addr %s132, 112
          %s134 = scalar_lea.vmem [#allocation2], %s133
          %s135 = smul.u32 7, %s9
          %s136 = smul.addr %s135, 4
          %s137 = scalar_lea.vmem %s1, %s136
          // Predicated region
          $region29: #{lenet_forward.3} parent=27 // pred_check
            _
          $region30: #{lenet_forward.3} parent=27 // pred_check_branch
            %139 = sbr.rel (0) target = $region32
          $region31: #{lenet_forward.3} parent=27 // pred_region
            // Predicated region
            $region33: #{lenet_forward.3} parent=31 // pred_check
              _
            $region34: #{lenet_forward.3} parent=31 // pred_check_branch
              %141 = sbr.rel (0) target = $region36
            $region35: #{lenet_forward.3} parent=31 // pred_region
              %s142 = scalar_lea.vmem %s137, 24
              %s143 = scalar_lea.vmem %s134, 24 [#allocation2]
              loop: start=0, step=1, limit=1
              $region37: #{lenet_forward.3} parent=35 // loop_pre_header
                _
              $region38: #{lenet_forward.3} parent=35 // loop_header
                %s145 = sphi 0, %s149
                %p146 = scmp.ge.s32.totalorder %s145, 1
                %s150 = sphi %s137, %s137
                %s151 = sphi %s134, %s134
              $region39: #{lenet_forward.3} parent=35 // loop_header_branch
                %148 = sbr.rel (%p146) target = $region43
              $region40: #{lenet_forward.3} parent=35 // loop_body
                %v152 = vld [vmem:[%s150] sm:$0xff]
                %153 = vst [vmem:[%s151] sm:$0xff] %v152
                %v154 = vld [vmem:[%s150 + $0x8] sm:$0xff]
                %155 = vst [vmem:[%s151 + $0x8] sm:$0xff] %v154
                %v156 = vld [vmem:[%s150 + $0x10] sm:$0xff]
                %157 = vst [vmem:[%s151 + $0x10] sm:$0xff] %v156
                %v158 = vld [vmem:[%s150 + $0x38] sm:$0xff]
                %159 = vst [vmem:[%s151 + $0x1c] sm:$0xff] %v158
                %v160 = vld [vmem:[%s150 + $0x40] sm:$0xff]
                %161 = vst [vmem:[%s151 + $0x24] sm:$0xff] %v160
                %v162 = vld [vmem:[%s150 + $0x48] sm:$0xff]
                %163 = vst [vmem:[%s151 + $0x2c] sm:$0xff] %v162
                %v164 = vld [vmem:[%s150 + $0x70] sm:$0xff]
                %165 = vst [vmem:[%s151 + $0x38] sm:$0xff] %v164
                %v166 = vld [vmem:[%s150 + $0x78] sm:$0xff]
                %167 = vst [vmem:[%s151 + $0x40] sm:$0xff] %v166
                %v168 = vld [vmem:[%s150 + $0x80] sm:$0xff]
                %169 = vst [vmem:[%s151 + $0x48] sm:$0xff] %v168
                %v170 = vld [vmem:[%s150 + $0xa8] sm:$0xff]
                %171 = vst [vmem:[%s151 + $0x54] sm:$0xff] %v170
                %v172 = vld [vmem:[%s150 + $0xb0] sm:$0xff]
                %173 = vst [vmem:[%s151 + $0x5c] sm:$0xff] %v172
                %v174 = vld [vmem:[%s150 + $0xb8] sm:$0xff]
                %175 = vst [vmem:[%s151 + $0x64] sm:$0xff] %v174
              $region41: #{lenet_forward.3} parent=35 // loop_footer
                %s149 = sadd.s32 1, %s145
              $region42: #{lenet_forward.3} parent=35 // loop_footer_branch
                %144 = sbr.rel target = $region38
              $region43: #{lenet_forward.3} parent=35 // loop_exit
                _
              loop: start=0, step=1, limit=1
              $region44: #{lenet_forward.3} parent=35 // loop_pre_header
                _
              $region45: #{lenet_forward.3} parent=35 // loop_header
                %s178 = sphi 0, %s182
                %p179 = scmp.ge.s32.totalorder %s178, 1
                %s183 = sphi %s142, %s142
                %s184 = sphi %s143, %s143
              $region46: #{lenet_forward.3} parent=35 // loop_header_branch
                %181 = sbr.rel (%p179) target = $region50
              $region47: #{lenet_forward.3} parent=35 // loop_body
                %v185 = vld [vmem:[%s183] sm:$0xf]
                %186 = vst [vmem:[%s184] sm:$0xf] %v185
                %v187 = vld [vmem:[%s183 + $0x38] sm:$0xf]
                %188 = vst [vmem:[%s184 + $0x1c] sm:$0xf] %v187
                %v189 = vld [vmem:[%s183 + $0x70] sm:$0xf]
                %190 = vst [vmem:[%s184 + $0x38] sm:$0xf] %v189
                %v191 = vld [vmem:[%s183 + $0xa8] sm:$0xf]
                %192 = vst [vmem:[%s184 + $0x54] sm:$0xf] %v191
              $region48: #{lenet_forward.3} parent=35 // loop_footer
                %s182 = sadd.s32 1, %s178
              $region49: #{lenet_forward.3} parent=35 // loop_footer_branch
                %177 = sbr.rel target = $region45
              $region50: #{lenet_forward.3} parent=35 // loop_exit
                _
            $region36: #{lenet_forward.3} parent=31 // pred_fallthru
              _
          $region32: #{lenet_forward.3} parent=27 // pred_fallthru
            _
          %193 = vnop
        $region28: #{lenet_forward.3} parent=23 // pred_fallthru
          _
      $region24: #{lenet_forward.3} parent=5 // pred_fallthru
        _
      %p194 = scmp.le.s32.totalorder 1, %s9
      %p195 = scmp.lt.s32.totalorder %s9, 3
      %p196 = pnand %p194, %p195
      %p197 = pneg %p196
      // Predicated region
      $region51: #{lenet_forward.3} parent=5 // pred_check
        _
      $region52: #{lenet_forward.3} parent=5 // pred_check_branch
        %199 = sbr.rel (%p196) target = $region54
      $region53: #{lenet_forward.3} parent=5 // pred_region
        %s200 = ssub.s32 %s9, 1
        %s201 = sand.u32 %s43, 1
        %s202 = sand.u32 %s43, 1
        %s203 = smul.addr %s202, 112
        %s204 = scalar_lea.vmem [#allocation2], %s203
        // Predicated region
        $region55: #{lenet_forward.3} parent=53 // pred_check
          %p205 = pneg %p56
        $region56: #{lenet_forward.3} parent=53 // pred_check_branch
          %207 = sbr.rel (%p205) target = $region58
        $region57: #{lenet_forward.3} parent=53 // pred_region
          _
        $region58: #{lenet_forward.3} parent=53 // pred_fallthru
          _
        %p208 = pneg %p30
        %p209 = pneg %p27
        %s210 = sand.u32 %s43, 1
        %s211 = sand.u32 %s43, 1
        %s212 = smul.addr %s211, 112
        %s213 = scalar_lea.vmem [#allocation2], %s212
        %p214 = pneg %p56
        %p215 = pneg %p53
        %p216 = pneg %p77
        %p217 = pneg %p74
        %p218 = pneg %p103
        %p219 = pneg %p100
        %s220 = smul.u32 7, %s14
        %p221 = scmp.lt.s32.totalorder %s220, 13
        %s222 = scalar_select %p221, %s220, 13
        %s223 = smul.addr %s222, 4
        %s224 = scalar_lea.vmem %s3, %s223
        %s225 = smul.u32 7, %s14
        %s226 = smul.u32 7, %s14
        %p227 = scmp.lt.s32.totalorder %s226, 13
        %s228 = scalar_select %p227, %s226, 13
        %s229 = smul.addr %s228, 4
        %s230 = scalar_lea.vmem %s3, %s229
        %s231 = smul.u32 7, %s14
        %v233 = vld [vmem:[%s0] sm:$0x7]
        %v234 = vld [vmem:[%s204] sm:$0xff]
        %v235 = vld [vmem:[%s204 + $0x8] sm:$0xff]
        %v236 = vld [vmem:[%s204 + $0x10] sm:$0xff]
        %v237 = vld [vmem:[%s204 + $0x18] sm:$0xf]
        %v238 = vld [vmem:[%s204 + $0x1c] sm:$0xff]
        %v239 = vld [vmem:[%s204 + $0x24] sm:$0xff]
        %v240 = vld [vmem:[%s204 + $0x2c] sm:$0xff]
        %v241 = vld [vmem:[%s204 + $0x34] sm:$0xf]
        %v242 = vld [vmem:[%s204 + $0x38] sm:$0xff]
        %v243 = vld [vmem:[%s204 + $0x40] sm:$0xff]
        %v244 = vld [vmem:[%s204 + $0x48] sm:$0xff]
        %v245 = vld [vmem:[%s204 + $0x50] sm:$0xf]
        %v246 = vld [vmem:[%s204 + $0x54] sm:$0xff]
        %v247 = vld [vmem:[%s204 + $0x5c] sm:$0xff]
        %v248 = vld [vmem:[%s204 + $0x64] sm:$0xff]
        %v249 = vld [vmem:[%s204 + $0x6c] sm:$0xf]
        %v250 = vld [vmem:[%s2] sm:$0x3f]
        %252 = vset.pattern.permute.xlu0 0
        %253 = vperm.xlu0 %252, %v250
        %v254 = vpop.permute.xlu0 %253
        %v272 = vunpack.c.l.b16 %v234
        %v273 = vunpack.c.h.b16 %v234
        %v274 = vunpack.c.l.b16 %v235
        %v275 = vunpack.c.h.b16 %v235
        %v276 = vunpack.c.l.b16 %v236
        %v277 = vunpack.c.h.b16 %v236
        %v278 = vunpack.c.l.b16 %v237
        %v279 = vunpack.c.l.b16 %v238
        %v280 = vunpack.c.h.b16 %v238
        %v281 = vunpack.c.l.b16 %v239
        %v282 = vunpack.c.h.b16 %v239
        %v283 = vunpack.c.l.b16 %v240
        %v284 = vunpack.c.h.b16 %v240
        %v285 = vunpack.c.l.b16 %v241
        %v286 = vunpack.c.l.b16 %v242
        %v287 = vunpack.c.h.b16 %v242
        %v288 = vunpack.c.l.b16 %v243
        %v289 = vunpack.c.h.b16 %v243
        %v290 = vunpack.c.l.b16 %v244
        %v291 = vunpack.c.h.b16 %v244
        %v292 = vunpack.c.l.b16 %v245
        %v293 = vunpack.c.l.b16 %v246
        %v294 = vunpack.c.h.b16 %v246
        %v295 = vunpack.c.l.b16 %v247
        %v296 = vunpack.c.h.b16 %v247
        %v297 = vunpack.c.l.b16 %v248
        %v298 = vunpack.c.h.b16 %v248
        %v299 = vunpack.c.l.b16 %v249
        %v300 = vpack.c.b16 %v279, %v272
        %v301 = vpack.c.b16 %v280, %v273
        %v302 = vpack.c.b16 %v281, %v274
        %v303 = vpack.c.b16 %v282, %v275
        %v304 = vpack.c.b16 %v283, %v276
        %v305 = vpack.c.b16 %v284, %v277
        %v306 = vpack.c.b16 %v285, %v278
        %v307 = vpack.c.b16 %v293, %v286
        %v308 = vpack.c.b16 %v294, %v287
        %v309 = vpack.c.b16 %v295, %v288
        %v310 = vpack.c.b16 %v296, %v289
        %v311 = vpack.c.b16 %v297, %v290
        %v312 = vpack.c.b16 %v298, %v291
        %v313 = vpack.c.b16 %v299, %v292
        %vm328 = vcmask 261120
        %v330 = vsel %vm328, %v233, 0
        %332 = vmatprep.subr.bf16.mxu0 %v301
        %333 = vmatpush1.bf16.msra.mxu0 %v300
        %334 = vmatprep.subr.bf16.mxu0 %v308
        %335 = vmatpush1.bf16.msra.mxu0 %v307
        %336 = vmatprep.subr.bf16.mxu0 0
        %337 = vmatpush1.bf16.msra.mxu0 0
        %338 = vmatprep.subr.bf16.mxu0 0
        %339 = vmatpush1.bf16.msra.mxu0 0
        %340 = vmatprep.subr.bf16.mxu0 0
        %341 = vmatpush1.bf16.msra.mxu0 0
        %342 = vmatprep.subr.bf16.mxu0 0
        %343 = vmatpush1.bf16.msra.mxu0 0
        %344 = vmatprep.subr.bf16.mxu0 0
        %345 = vmatpush1.bf16.msra.mxu0 0
        %346 = vmatprep.subr.bf16.mxu0 0
        %347 = vmatpush1.bf16.msra.mxu0 0
        %348 = vmatprep.subr.bf16.mxu0 0
        %349 = vmatpush1.bf16.msra.mxu0 0
        %350 = vmatprep.subr.bf16.mxu0 0
        %351 = vmatpush1.bf16.msra.mxu0 0
        %352 = vmatprep.subr.bf16.mxu0 0
        %353 = vmatpush1.bf16.msra.mxu0 0
        %354 = vmatprep.subr.bf16.mxu0 0
        %355 = vmatpush1.bf16.msra.mxu0 0
        %356 = vmatprep.subr.bf16.mxu0 0
        %357 = vmatpush1.bf16.msra.mxu0 0
        %358 = vmatprep.subr.bf16.mxu0 0
        %359 = vmatpush1.bf16.msra.mxu0 0
        %360 = vmatprep.subr.bf16.mxu0 0
        %361 = vmatpush1.bf16.msra.mxu0 0
        %362 = vmatprep.subr.bf16.mxu0 0
        %363 = vmatpush1.bf16.msra.mxu0 0
        %364 = vmatprep.mubr.bf16.mxu0 0
        %365 = vmatmul.mubr.bf16.gmra.mrb[0].mxu0 %v330
        %v366 = vpop.f32.mrb[0].mxu0
        %v367 = vadd.f32 %v254, %v366
        %v368 = vpop.f32.mrb[0].mxu0
        %v369 = vadd.f32 %v254, %v368
        %v370 = vpop.f32.mrb[0].mxu0
        %v371 = vpop.f32.mrb[0].mxu0
        %372 = vdwg.mxu0
        %373 = vmatprep.subr.bf16.mxu0 %v303
        %374 = vmatpush1.bf16.msra.mxu0 %v302
        %375 = vmatprep.subr.bf16.mxu0 %v310
        %376 = vmatpush1.bf16.msra.mxu0 %v309
        %377 = vmatprep.subr.bf16.mxu0 0
        %378 = vmatpush1.bf16.msra.mxu0 0
        %379 = vmatprep.subr.bf16.mxu0 0
        %380 = vmatpush1.bf16.msra.mxu0 0
        %381 = vmatprep.subr.bf16.mxu0 0
        %382 = vmatpush1.bf16.msra.mxu0 0
        %383 = vmatprep.subr.bf16.mxu0 0
        %384 = vmatpush1.bf16.msra.mxu0 0
        %385 = vmatprep.subr.bf16.mxu0 0
        %386 = vmatpush1.bf16.msra.mxu0 0
        %387 = vmatprep.subr.bf16.mxu0 0
        %388 = vmatpush1.bf16.msra.mxu0 0
        %389 = vmatprep.subr.bf16.mxu0 0
        %390 = vmatpush1.bf16.msra.mxu0 0
        %391 = vmatprep.subr.bf16.mxu0 0
        %392 = vmatpush1.bf16.msra.mxu0 0
        %393 = vmatprep.subr.bf16.mxu0 0
        %394 = vmatpush1.bf16.msra.mxu0 0
        %395 = vmatprep.subr.bf16.mxu0 0
        %396 = vmatpush1.bf16.msra.mxu0 0
        %397 = vmatprep.subr.bf16.mxu0 0
        %398 = vmatpush1.bf16.msra.mxu0 0
        %399 = vmatprep.subr.bf16.mxu0 0
        %400 = vmatpush1.bf16.msra.mxu0 0
        %401 = vmatprep.subr.bf16.mxu0 0
        %402 = vmatpush1.bf16.msra.mxu0 0
        %403 = vmatprep.subr.bf16.mxu0 0
        %404 = vmatpush1.bf16.msra.mxu0 0
        %405 = vmatprep.mubr.bf16.mxu0 0
        %406 = vmatmul.mubr.bf16.gmra.mrb[0].mxu0 %v330
        %v407 = vpop.f32.mrb[0].mxu0
        %v408 = vadd.f32 %v254, %v407
        %v409 = vpop.f32.mrb[0].mxu0
        %v410 = vadd.f32 %v254, %v409
        %v411 = vpop.f32.mrb[0].mxu0
        %v412 = vpop.f32.mrb[0].mxu0
        %413 = vdwg.mxu0
        %414 = vmatprep.subr.bf16.mxu0 %v305
        %415 = vmatpush1.bf16.msra.mxu0 %v304
        %416 = vmatprep.subr.bf16.mxu0 %v312
        %417 = vmatpush1.bf16.msra.mxu0 %v311
        %418 = vmatprep.subr.bf16.mxu0 0
        %419 = vmatpush1.bf16.msra.mxu0 0
        %420 = vmatprep.subr.bf16.mxu0 0
        %421 = vmatpush1.bf16.msra.mxu0 0
        %422 = vmatprep.subr.bf16.mxu0 0
        %423 = vmatpush1.bf16.msra.mxu0 0
        %424 = vmatprep.subr.bf16.mxu0 0
        %425 = vmatpush1.bf16.msra.mxu0 0
        %426 = vmatprep.subr.bf16.mxu0 0
        %427 = vmatpush1.bf16.msra.mxu0 0
        %428 = vmatprep.subr.bf16.mxu0 0
        %429 = vmatpush1.bf16.msra.mxu0 0
        %430 = vmatprep.subr.bf16.mxu0 0
        %431 = vmatpush1.bf16.msra.mxu0 0
        %432 = vmatprep.subr.bf16.mxu0 0
        %433 = vmatpush1.bf16.msra.mxu0 0
        %434 = vmatprep.subr.bf16.mxu0 0
        %435 = vmatpush1.bf16.msra.mxu0 0
        %436 = vmatprep.subr.bf16.mxu0 0
        %437 = vmatpush1.bf16.msra.mxu0 0
        %438 = vmatprep.subr.bf16.mxu0 0
        %439 = vmatpush1.bf16.msra.mxu0 0
        %440 = vmatprep.subr.bf16.mxu0 0
        %441 = vmatpush1.bf16.msra.mxu0 0
        %442 = vmatprep.subr.bf16.mxu0 0
        %443 = vmatpush1.bf16.msra.mxu0 0
        %444 = vmatprep.subr.bf16.mxu0 0
        %445 = vmatpush1.bf16.msra.mxu0 0
        %446 = vmatprep.mubr.bf16.mxu0 0
        %447 = vmatmul.mubr.bf16.gmra.mrb[0].mxu0 %v330
        %v448 = vpop.f32.mrb[0].mxu0
        %v449 = vadd.f32 %v254, %v448
        %v450 = vpop.f32.mrb[0].mxu0
        %v451 = vadd.f32 %v254, %v450
        %v452 = vpop.f32.mrb[0].mxu0
        %v453 = vpop.f32.mrb[0].mxu0
        %454 = vdwg.mxu0
        %455 = vmatprep.subr.bf16.mxu0 0
        %456 = vmatpush1.bf16.msra.mxu0 %v306
        %457 = vmatprep.subr.bf16.mxu0 0
        %458 = vmatpush1.bf16.msra.mxu0 %v313
        %459 = vmatprep.subr.bf16.mxu0 0
        %460 = vmatpush1.bf16.msra.mxu0 0
        %461 = vmatprep.subr.bf16.mxu0 0
        %462 = vmatpush1.bf16.msra.mxu0 0
        %463 = vmatprep.subr.bf16.mxu0 0
        %464 = vmatpush1.bf16.msra.mxu0 0
        %465 = vmatprep.subr.bf16.mxu0 0
        %466 = vmatpush1.bf16.msra.mxu0 0
        %467 = vmatprep.subr.bf16.mxu0 0
        %468 = vmatpush1.bf16.msra.mxu0 0
        %469 = vmatprep.subr.bf16.mxu0 0
        %470 = vmatpush1.bf16.msra.mxu0 0
        %471 = vmatprep.subr.bf16.mxu0 0
        %472 = vmatpush1.bf16.msra.mxu0 0
        %473 = vmatprep.subr.bf16.mxu0 0
        %474 = vmatpush1.bf16.msra.mxu0 0
        %475 = vmatprep.subr.bf16.mxu0 0
        %476 = vmatpush1.bf16.msra.mxu0 0
        %477 = vmatprep.subr.bf16.mxu0 0
        %478 = vmatpush1.bf16.msra.mxu0 0
        %479 = vmatprep.subr.bf16.mxu0 0
        %480 = vmatpush1.bf16.msra.mxu0 0
        %481 = vmatprep.subr.bf16.mxu0 0
        %482 = vmatpush1.bf16.msra.mxu0 0
        %483 = vmatprep.subr.bf16.mxu0 0
        %484 = vmatpush1.bf16.msra.mxu0 0
        %485 = vmatprep.subr.bf16.mxu0 0
        %486 = vmatpush1.bf16.msra.mxu0 0
        %487 = vmatprep.mubr.bf16.mxu0 0
        %488 = vmatmul.mubr.bf16.gmra.mrb[0].mxu0 %v330
        %v489 = vpop.f32.mrb[0].mxu0
        %v490 = vadd.f32 %v254, %v489
        %v491 = vpop.f32.mrb[0].mxu0
        %v492 = vpop.f32.mrb[0].mxu0
        %v493 = vpop.f32.mrb[0].mxu0
        %494 = vdwg.mxu0
        %v495 = vmax.f32 %v367, 0.0
        %v496 = vmax.f32 %v369, 0.0
        %v497 = vmax.f32 %v408, 0.0
        %v498 = vmax.f32 %v410, 0.0
        %v499 = vmax.f32 %v449, 0.0
        %v500 = vmax.f32 %v451, 0.0
        %v501 = vmax.f32 %v490, 0.0
        %v502 = vpack.c.bf16 %v495, %v495
        %v503 = vpack.c.bf16 %v496, %v496
        %v504 = vpack.c.bf16 %v497, %v497
        %v505 = vpack.c.bf16 %v498, %v498
        %v506 = vpack.c.bf16 %v499, %v499
        %v507 = vpack.c.bf16 %v500, %v500
        %v508 = vpack.c.bf16 %v501, %v501
        %v516 = vunpack.c.l.b16 %v502
        %v517 = vunpack.c.l.b16 %v503
        %v518 = vunpack.c.l.b16 %v504
        %v519 = vunpack.c.l.b16 %v505
        %v520 = vunpack.c.l.b16 %v506
        %v521 = vunpack.c.l.b16 %v507
        %v522 = vunpack.c.l.b16 %v508
        %v523 = vpack.c.b16 %v517, %v516
        %v524 = vpack.c.b16 %v519, %v518
        %v525 = vpack.c.b16 %v521, %v520
        %v526 = vpack.c.b16 %v522, %v522
        %531 = vst [vmem:[%s230] sm:$0x77] %v523
        %532 = vst [vmem:[%s230 + $0x8] sm:$0x77] %v524
        %533 = vst [vmem:[%s230 + $0x10] sm:$0x77] %v525
        %534 = vst [vmem:[%s230 + $0x18] sm:$0x7] %v526
        %s535 = smul.u32 7, %s14
        %p536 = scmp.lt.s32.totalorder %s535, 13
        %s537 = scalar_select %p536, %s535, 13
        %s538 = smul.addr %s537, 4
        %s539 = scalar_lea.vmem %s3, %s538
        // Predicated region
        $region59: #{lenet_forward.3} parent=53 // pred_check
          %p540 = pneg %p100
        $region60: #{lenet_forward.3} parent=53 // pred_check_branch
          %542 = sbr.rel (%p540) target = $region62
        $region61: #{lenet_forward.3} parent=53 // pred_region
          %s543 = smul.u32 7, %s14
        $region62: #{lenet_forward.3} parent=53 // pred_fallthru
          _
      $region54: #{lenet_forward.3} parent=5 // pred_fallthru
        _
      %p544 = scmp.le.s32.totalorder 2, %s9
      // Predicated region
      $region63: #{lenet_forward.3} parent=5 // pred_check
        %p545 = pneg %p544
      $region64: #{lenet_forward.3} parent=5 // pred_check_branch
        %547 = sbr.rel (%p545) target = $region66
      $region65: #{lenet_forward.3} parent=5 // pred_region
        %s548 = ssub.s32 %s9, 2
        // Predicated region
        $region67: #{lenet_forward.3} parent=65 // pred_check
          %p549 = pneg %p106
        $region68: #{lenet_forward.3} parent=65 // pred_check_branch
          %551 = sbr.rel (%p549) target = $region70
        $region69: #{lenet_forward.3} parent=65 // pred_region
          %s552 = smul.u32 7, %s15
          %p553 = scmp.lt.s32.totalorder %s552, 13
          %s554 = scalar_select %p553, %s552, 13
          %s555 = smul.addr %s554, 4
          %s556 = scalar_lea.vmem %s3, %s555
        $region70: #{lenet_forward.3} parent=65 // pred_fallthru
          _
      $region66: #{lenet_forward.3} parent=5 // pred_fallthru
        _
    $region6: #{lenet_forward.3} parent=1 // loop_footer
      %s13 = sadd.s32 1, %s9
    $region7: #{lenet_forward.3} parent=1 // loop_footer_branch
      %8 = sbr.rel target = $region3
    $region8: #{lenet_forward.3} parent=1 // loop_exit
      _

// kernel: squeeze.214
$region0: #{squeeze.214}
  %s0 = inlined_call_operand.vmem [shape: bf16[2,10,10], index: 0, kind: input, shape index: {}]
  %s1 = inlined_call_operand.vmem [shape: bf16[1,200], index: 1, kind: output, shape index: {}]
  $region1: #{squeeze.214} parent=0
    #allocation0 [shape = 'u8[8192]{0}', space=vmem, size = 0x2000, scoped, tag = 'scoped mem for output reshape']
    #allocation1 [shape = 'u8[16384]{0}', space=vmem, size = 0x4000, scoped, tag = 'scoped mem for input reshape']
    %s3 = smul.u32 4, 2
    %s4 = sshllo.u32 0, %s3
    %s5 = smul.addr 4, 3
    %s6 = scalar_lea.vmem %s0, %s5
    %s7 = sshrl.u32 %s4, 1
    %s8 = sor.u32 %s4, %s7
    %s9 = sand.u32 %s8, 85
    %s10 = sshrl.u32 %s9, 1
    %s11 = sor.u32 %s9, %s10
    %s12 = sand.u32 51, %s11
    %s13 = sshrl.u32 %s12, 2
    %s14 = sor.u32 %s12, %s13
    %s15 = sand.u32 15, %s14
    %v16 = vld [vmem:[%s6] sm:%s15]
    %v17 = vunpack.c.l.bf16 %v16
    %v18 = vunpack.c.h.bf16 %v16
    %s19 = scalar_lea.vmem [#allocation1], 24
    %20 = vst [vmem:[%s19] sm:%s4] %v17
    %s21 = smul.addr 4, 2
    %s22 = scalar_lea.vmem %s0, %s21
    %s23 = sshrl.u32 %s4, 1
    %s24 = sor.u32 %s4, %s23
    %s25 = sand.u32 %s24, 85
    %s26 = sshrl.u32 %s25, 1
    %s27 = sor.u32 %s25, %s26
    %s28 = sand.u32 51, %s27
    %s29 = sshrl.u32 %s28, 2
    %s30 = sor.u32 %s28, %s29
    %s31 = sand.u32 15, %s30
    %v32 = vld [vmem:[%s22] sm:%s31]
    %v33 = vunpack.c.l.bf16 %v32
    %v34 = vunpack.c.h.bf16 %v32
    %s35 = scalar_lea.vmem [#allocation1], 16
    %36 = vst [vmem:[%s35] sm:%s4] %v33
    %s37 = scalar_lea.vmem %s0, 4
    %s38 = sshrl.u32 %s4, 1
    %s39 = sor.u32 %s4, %s38
    %s40 = sand.u32 %s39, 85
    %s41 = sshrl.u32 %s40, 1
    %s42 = sor.u32 %s40, %s41
    %s43 = sand.u32 51, %s42
    %s44 = sshrl.u32 %s43, 2
    %s45 = sor.u32 %s43, %s44
    %s46 = sand.u32 15, %s45
    %v47 = vld [vmem:[%s37] sm:%s46]
    %v48 = vunpack.c.l.bf16 %v47
    %v49 = vunpack.c.h.bf16 %v47
    %s50 = scalar_lea.vmem [#allocation1], 8
    %51 = vst [vmem:[%s50] sm:%s4] %v48
    %s52 = sshrl.u32 %s4, 1
    %s53 = sor.u32 %s4, %s52
    %s54 = sand.u32 %s53, 85
    %s55 = sshrl.u32 %s54, 1
    %s56 = sor.u32 %s54, %s55
    %s57 = sand.u32 51, %s56
    %s58 = sshrl.u32 %s57, 2
    %s59 = sor.u32 %s57, %s58
    %s60 = sand.u32 15, %s59
    %v61 = vld [vmem:[%s0] sm:%s60]
    %v62 = vunpack.c.l.bf16 %v61
    %v63 = vunpack.c.h.bf16 %v61
    %64 = vst [vmem:[#allocation1] sm:%s4] %v62
    %v65 = vld [vmem:[#allocation1] sm:$0x1]
    %vm66 = vcmask 80896
    %67 = vst.msk [vmem:[#allocation0] sm:$0x1] %vm66, %v65
    %s68 = scalar_lea.vmem [#allocation1], 18
    %v69 = vld [vmem:[%s68] sm:$0x1]
    %s70 = scalar_lea.vmem [#allocation1], 18
    %v71 = vld [vmem:[%s70] sm:$0x1]
    %vm72 = vcmask 64512
    %v73 = vsel %vm72, %v71, %v69
    %74 = vrot.lane.b32.xlu0 %v73, 120
    %v75 = vpop.permute.xlu0 %74
    %vm76 = vcmask 15360
    %s77 = scalar_lea.vmem [#allocation0], 8
    %78 = vst.msk [vmem:[%s77] sm:$0x1] %vm76, %v75
    %vm79 = vcmask 1048512
    %80 = vst.msk [vmem:[#allocation0] sm:$0x1] %vm79, %v75
    %s81 = scalar_lea.vmem [#allocation1], 17
    %v82 = vld [vmem:[%s81] sm:$0x1]
    %83 = vrot.lane.b32.xlu0 %v82, 110
    %v84 = vpop.permute.xlu0 %83
    %vm85 = vcmask 982896
    %86 = vst.msk [vmem:[#allocation0] sm:$0x1] %vm85, %v84
    %s87 = scalar_lea.vmem [#allocation1], 16
    %v88 = vld [vmem:[%s87] sm:$0x1]
    %89 = vrot.lane.b32.xlu0 %v88, 100
    %v90 = vpop.permute.xlu0 %89
    %vm91 = vcmask 900896
    %92 = vst.msk [vmem:[#allocation0] sm:$0x1] %vm91, %v90
    %s93 = scalar_lea.vmem [#allocation1], 9
    %v94 = vld [vmem:[%s93] sm:$0x1]
    %95 = vrot.lane.b32.xlu0 %v94, 90
    %v96 = vpop.permute.xlu0 %95
    %vm97 = vcmask 818896
    %98 = vst.msk [vmem:[#allocation0] sm:$0x1] %vm97, %v96
    %s99 = scalar_lea.vmem [#allocation1], 8
    %v100 = vld [vmem:[%s99] sm:$0x1]
    %101 = vrot.lane.b32.xlu0 %v100, 80
    %v102 = vpop.permute.xlu0 %101
    %vm103 = vcmask 736896
    %104 = vst.msk [vmem:[#allocation0] sm:$0x1] %vm103, %v102
    %s105 = scalar_lea.vmem [#allocation1], 7
    %v106 = vld [vmem:[%s105] sm:$0x1]
    %107 = vrot.lane.b32.xlu0 %v106, 70
    %v108 = vpop.permute.xlu0 %107
    %vm109 = vcmask 654896
    %110 = vst.msk [vmem:[#allocation0] sm:$0x1] %vm109, %v108
    %s111 = scalar_lea.vmem [#allocation1], 25
    %v112 = vld [vmem:[%s111] sm:$0x1]
    %113 = vrot.lane.b32.xlu0 %v112, 62
    %v114 = vpop.permute.xlu0 %113
    %vm115 = vcmask 589296
    %s116 = scalar_lea.vmem [#allocation0], 8
    %117 = vst.msk [vmem:[%s116] sm:$0x1] %vm115, %v114
    %s118 = scalar_lea.vmem [#allocation1], 6
    %v119 = vld [vmem:[%s118] sm:$0x1]
    %120 = vrot.lane.b32.xlu0 %v119, 60
    %v121 = vpop.permute.xlu0 %120
    %vm122 = vcmask 572896
    %123 = vst.msk [vmem:[#allocation0] sm:$0x1] %vm122, %v121
    %s124 = scalar_lea.vmem [#allocation1], 24
    %v125 = vld [vmem:[%s124] sm:$0x1]
    %126 = vrot.lane.b32.xlu0 %v125, 52
    %v127 = vpop.permute.xlu0 %126
    %vm128 = vcmask 507296
    %s129 = scalar_lea.vmem [#allocation0], 8
    %130 = vst.msk [vmem:[%s129] sm:$0x1] %vm128, %v127
    %s131 = scalar_lea.vmem [#allocation1], 5
    %v132 = vld [vmem:[%s131] sm:$0x1]
    %133 = vrot.lane.b32.xlu0 %v132, 50
    %v134 = vpop.permute.xlu0 %133
    %vm135 = vcmask 490896
    %136 = vst.msk [vmem:[#allocation0] sm:$0x1] %vm135, %v134
    %s137 = scalar_lea.vmem [#allocation1], 23
    %v138 = vld [vmem:[%s137] sm:$0x1]
    %139 = vrot.lane.b32.xlu0 %v138, 42
    %v140 = vpop.permute.xlu0 %139
    %vm141 = vcmask 425296
    %s142 = scalar_lea.vmem [#allocation0], 8
    %143 = vst.msk [vmem:[%s142] sm:$0x1] %vm141, %v140
    %s144 = scalar_lea.vmem [#allocation1], 4
    %v145 = vld [vmem:[%s144] sm:$0x1]
    %146 = vrot.lane.b32.xlu0 %v145, 40
    %v147 = vpop.permute.xlu0 %146
    %vm148 = vcmask 408896
    %149 = vst.msk [vmem:[#allocation0] sm:$0x1] %vm148, %v147
    %s150 = scalar_lea.vmem [#allocation1], 22
    %v151 = vld [vmem:[%s150] sm:$0x1]
    %152 = vrot.lane.b32.xlu0 %v151, 32
    %v153 = vpop.permute.xlu0 %152
    %vm154 = vcmask 343296
    %s155 = scalar_lea.vmem [#allocation0], 8
    %156 = vst.msk [vmem:[%s155] sm:$0x1] %vm154, %v153
    %s157 = scalar_lea.vmem [#allocation1], 3
    %v158 = vld [vmem:[%s157] sm:$0x1]
    %159 = vrot.lane.b32.xlu0 %v158, 30
    %v160 = vpop.permute.xlu0 %159
    %vm161 = vcmask 326896
    %162 = vst.msk [vmem:[#allocation0] sm:$0x1] %vm161, %v160
    %s163 = scalar_lea.vmem [#allocation1], 21
    %v164 = vld [vmem:[%s163] sm:$0x1]
    %165 = vrot.lane.b32.xlu0 %v164, 22
    %v166 = vpop.permute.xlu0 %165
    %vm167 = vcmask 261296
    %s168 = scalar_lea.vmem [#allocation0], 8
    %169 = vst.msk [vmem:[%s168] sm:$0x1] %vm167, %v166
    %s170 = scalar_lea.vmem [#allocation1], 2
    %v171 = vld [vmem:[%s170] sm:$0x1]
    %172 = vrot.lane.b32.xlu0 %v171, 20
    %v173 = vpop.permute.xlu0 %172
    %vm174 = vcmask 244896
    %175 = vst.msk [vmem:[#allocation0] sm:$0x1] %vm174, %v173
    %s176 = scalar_lea.vmem [#allocation1], 20
    %v177 = vld [vmem:[%s176] sm:$0x1]
    %178 = vrot.lane.b32.xlu0 %v177, 12
    %v179 = vpop.permute.xlu0 %178
    %vm180 = vcmask 179296
    %s181 = scalar_lea.vmem [#allocation0], 8
    %182 = vst.msk [vmem:[%s181] sm:$0x1] %vm180, %v179
    %s183 = scalar_lea.vmem [#allocation1], 1
    %v184 = vld [vmem:[%s183] sm:$0x1]
    %185 = vrot.lane.b32.xlu0 %v184, 10
    %v186 = vpop.permute.xlu0 %185
    %vm187 = vcmask 162896
    %188 = vst.msk [vmem:[#allocation0] sm:$0x1] %vm187, %v186
    %s189 = scalar_lea.vmem [#allocation1], 19
    %v190 = vld [vmem:[%s189] sm:$0x1]
    %191 = vrot.lane.b32.xlu0 %v190, 2
    %v192 = vpop.permute.xlu0 %191
    %vm193 = vcmask 97296
    %s194 = scalar_lea.vmem [#allocation0], 8
    %195 = vst.msk [vmem:[%s194] sm:$0x1] %vm193, %v192
    %s197 = smul.u32 1, 2
    %s198 = sshllo.u32 0, %s197
    %s199 = sshrl.u32 %s197, 1
    %v200 = vld [vmem:[#allocation0] sm:%s198]
    %v201 = vpack.c.bf16 0.0, %v200
    %s202 = sshllo.u32 0, %s199
    %203 = vst [vmem:[%s1] sm:%s202] %v201
    %s204 = scalar_lea.vmem [#allocation0], 8
    %v205 = vld [vmem:[%s204] sm:%s198]
    %v206 = vpack.c.bf16 0.0, %v205
    %s207 = sshllo.u32 0, %s199
    %s208 = scalar_lea.vmem %s1, 1
    %209 = vst [vmem:[%s208] sm:%s207] %v206

// kernel: lenet_forward.4
$region0: #{lenet_forward.4}
  #allocation0 [shape = 'u32[]', space=smem, size = 0x4, offset = 0x4, fixed_abs, tag = 'smem constant byte address 0x4 - core index']
  #allocation1 [shape = 'u32[144,128]{1,0:T(1,128)}', space=vmem, size = 0x12000, scoped, tag = 'internal scratch']
  %s0 = inlined_call_operand.vmem [shape: bf16[16,160], index: 0, kind: input, shape index: {}]
  %s1 = inlined_call_operand.vmem [shape: bf16[160,256], index: 1, kind: input, shape index: {}]
  %s2 = inlined_call_operand.vmem [shape: f32[16,1], index: 2, kind: input, shape index: {}]
  %s3 = inlined_call_operand.vmem [shape: bf16[16,256], index: 3, kind: output, shape index: {}]
  %s4 = sld [smem:[#allocation0]]
  $region123: #{lenet_forward.4} parent=0
    _
  %s6 = ssub.s32 1, %s4
  %s7 = scalar_select 0, %s6, %s4
  $region1: #{lenet_forward.4} parent=0
    #allocation2 [shape = 'u8[81920]{0}', space=vmem, size = 0x14000, scoped, tag = 'input window, operand 1']
    #allocation3 [shape = 'u8[8192]{0}', space=vmem, size = 0x2000, scoped, tag = 'output window, operand 0']
    loop: start=0, step=1, limit=4
    $region2: #{lenet_forward.4} parent=1 // loop_pre_header
      _
    $region3: #{lenet_forward.4} parent=1 // loop_header
      %s9 = sphi 0, %s13
      %p10 = scmp.ge.s32.totalorder %s9, 4
      %s17 = sphi 0, %s17
      %s19 = sphi 0, %s17
      %s20 = sphi 0, %s19
      %s34 = sphi 0, %s20
      %s40 = sphi 0, %s42
      %s43 = sphi 0, %s40
      %s44 = sphi 0, %s43
      %s60 = sphi 0, %s44
      %s64 = sphi 0, %s64
      %s66 = sphi 0, %s64
      %s67 = sphi 0, %s66
      %s81 = sphi 0, %s67
      %s87 = sphi 0, %s89
      %s90 = sphi 0, %s87
      %s91 = sphi 0, %s90
      %s107 = sphi 0, %s91
    $region4: #{lenet_forward.4} parent=1 // loop_header_branch
      %12 = sbr.rel (%p10) target = $region8
    $region5: #{lenet_forward.4} parent=1 // loop_body
      %s14 = ssub.s32 %s9, 1
      %s15 = ssub.s32 %s9, 2
      %s16 = sadd.s32 %s9, 1
      %s18 = sadd.s32 %s17, 1
      %p21 = scmp.eq.s32.totalorder %s9, 1
      %p22 = scmp.ne.s32.totalorder %s17, %s19
      %p23 = scmp.eq.s32.totalorder %s9, 0
      %p24 = por %p22, %p23
      %p25 = scmp.ne.s32.totalorder %s17, %s19
      %p26 = scmp.eq.s32.totalorder %s14, 1
      %p27 = por %p25, %p26
      %p28 = scmp.ne.s32.totalorder %s19, %s20
      %p29 = scmp.eq.s32.totalorder %s14, 0
      %p30 = por %p28, %p29
      %p31 = scmp.ne.s32.totalorder %s19, %s20
      %p32 = scmp.eq.s32.totalorder %s15, 1
      %p33 = por %p31, %p32
      %p35 = scmp.ne.s32.totalorder %s20, %s34
      %p36 = scmp.eq.s32.totalorder %s15, 0
      %p37 = por %p35, %p36
      %s38 = ssub.s32 %s9, %s16
      %p39 = scmp.eq.s32.totalorder %s38, 0
      %s41 = sadd.s32 %s40, 1
      %s42 = scalar_select %p39, %s40, %s41
      %p45 = pneg %p39
      %p46 = scmp.eq.s32.totalorder %s9, 1
      %p47 = por %p45, %p46
      %p48 = scmp.ne.s32.totalorder %s40, %s43
      %p49 = scmp.eq.s32.totalorder %s9, 0
      %p50 = por %p48, %p49
      %p51 = scmp.ne.s32.totalorder %s40, %s43
      %p52 = scmp.eq.s32.totalorder %s14, 1
      %p53 = por %p51, %p52
      %p54 = scmp.ne.s32.totalorder %s43, %s44
      %p55 = scmp.eq.s32.totalorder %s14, 0
      %p56 = por %p54, %p55
      %p57 = scmp.ne.s32.totalorder %s43, %s44
      %p58 = scmp.eq.s32.totalorder %s15, 1
      %p59 = por %p57, %p58
      %p61 = scmp.ne.s32.totalorder %s44, %s60
      %p62 = scmp.eq.s32.totalorder %s15, 0
      %p63 = por %p61, %p62
      %s65 = sadd.s32 %s64, 1
      %p68 = scmp.eq.s32.totalorder %s9, 1
      %p69 = scmp.ne.s32.totalorder %s64, %s66
      %p70 = scmp.eq.s32.totalorder %s9, 0
      %p71 = por %p69, %p70
      %p72 = scmp.ne.s32.totalorder %s64, %s66
      %p73 = scmp.eq.s32.totalorder %s14, 1
      %p74 = por %p72, %p73
      %p75 = scmp.ne.s32.totalorder %s66, %s67
      %p76 = scmp.eq.s32.totalorder %s14, 0
      %p77 = por %p75, %p76
      %p78 = scmp.ne.s32.totalorder %s66, %s67
      %p79 = scmp.eq.s32.totalorder %s15, 1
      %p80 = por %p78, %p79
      %p82 = scmp.ne.s32.totalorder %s67, %s81
      %p83 = scmp.eq.s32.totalorder %s15, 0
      %p84 = por %p82, %p83
      %s85 = ssub.s32 %s9, %s16
      %p86 = scmp.eq.s32.totalorder %s85, 0
      %s88 = sadd.s32 %s87, 1
      %s89 = scalar_select %p86, %s87, %s88
      %p92 = pneg %p86
      %p93 = scmp.eq.s32.totalorder %s9, 1
      %p94 = por %p92, %p93
      %p95 = scmp.ne.s32.totalorder %s87, %s90
      %p96 = scmp.eq.s32.totalorder %s9, 0
      %p97 = por %p95, %p96
      %p98 = scmp.ne.s32.totalorder %s87, %s90
      %p99 = scmp.eq.s32.totalorder %s14, 1
      %p100 = por %p98, %p99
      %p101 = scmp.ne.s32.totalorder %s90, %s91
      %p102 = scmp.eq.s32.totalorder %s14, 0
      %p103 = por %p101, %p102
      %p104 = scmp.ne.s32.totalorder %s90, %s91
      %p105 = scmp.eq.s32.totalorder %s15, 1
      %p106 = por %p104, %p105
      %p108 = scmp.ne.s32.totalorder %s91, %s107
      %p109 = scmp.eq.s32.totalorder %s15, 0
      %p110 = por %p108, %p109
      %p111 = scmp.le.s32.totalorder 1, %s9
      %p112 = scmp.lt.s32.totalorder %s9, 3
      %p113 = pnand %p111, %p112
      %p114 = pneg %p113
      // Predicated region
      $region9: #{lenet_forward.4} parent=5 // pred_check
        _
      $region10: #{lenet_forward.4} parent=5 // pred_check_branch
        %116 = sbr.rel (%p113) target = $region12
      $region11: #{lenet_forward.4} parent=5 // pred_region
        %s117 = ssub.s32 %s9, 1
        // Predicated region
        $region13: #{lenet_forward.4} parent=11 // pred_check
          %p118 = pneg %p30
        $region14: #{lenet_forward.4} parent=11 // pred_check_branch
          %120 = sbr.rel (%p118) target = $region16
        $region15: #{lenet_forward.4} parent=11 // pred_region
          _
        $region16: #{lenet_forward.4} parent=11 // pred_fallthru
          _
        // Predicated region
        $region17: #{lenet_forward.4} parent=11 // pred_check
          %p121 = pneg %p77
        $region18: #{lenet_forward.4} parent=11 // pred_check_branch
          %123 = sbr.rel (%p121) target = $region20
        $region19: #{lenet_forward.4} parent=11 // pred_region
          _
        $region20: #{lenet_forward.4} parent=11 // pred_fallthru
          _
      $region12: #{lenet_forward.4} parent=5 // pred_fallthru
        _
      %p124 = scmp.lt.s32.totalorder %s9, 2
      // Predicated region
      $region21: #{lenet_forward.4} parent=5 // pred_check
        %p125 = pneg %p124
      $region22: #{lenet_forward.4} parent=5 // pred_check_branch
        %127 = sbr.rel (%p125) target = $region24
      $region23: #{lenet_forward.4} parent=5 // pred_region
        // Predicated region
        $region25: #{lenet_forward.4} parent=23 // pred_check
          %p128 = pneg %p50
        $region26: #{lenet_forward.4} parent=23 // pred_check_branch
          %130 = sbr.rel (%p128) target = $region28
        $region27: #{lenet_forward.4} parent=23 // pred_region
          %s131 = sand.u32 %s40, 1
          %s132 = sand.u32 %s40, 1
          %s133 = smul.addr %s132, 80
          %s134 = scalar_lea.vmem [#allocation2], %s133
          %s135 = smul.addr %s9, 4
          %s136 = scalar_lea.vmem %s1, %s135
          // Predicated region
          $region29: #{lenet_forward.4} parent=27 // pred_check
            _
          $region30: #{lenet_forward.4} parent=27 // pred_check_branch
            %138 = sbr.rel (0) target = $region32
          $region31: #{lenet_forward.4} parent=27 // pred_region
            // Predicated region
            $region33: #{lenet_forward.4} parent=31 // pred_check
              _
            $region34: #{lenet_forward.4} parent=31 // pred_check_branch
              %140 = sbr.rel target = $region36
            $region35: #{lenet_forward.4} parent=31 // pred_region
              // Predicated region
              $region48: #{lenet_forward.4} parent=35 // pred_check
                _
              $region49: #{lenet_forward.4} parent=35 // pred_check_branch
                %193 = sbr.rel (0) target = $region51
              $region50: #{lenet_forward.4} parent=35 // pred_region
                loop: start=0, step=1, limit=1
                $region52: #{lenet_forward.4} parent=50 // loop_pre_header
                  _
                $region53: #{lenet_forward.4} parent=50 // loop_header
                  %s195 = sphi 0, %s199
                  %p196 = scmp.ge.s32.totalorder %s195, 1
                  %s200 = sphi %s136, %s136
                  %s201 = sphi %s134, %s134
                $region54: #{lenet_forward.4} parent=50 // loop_header_branch
                  %198 = sbr.rel (%p196) target = $region58
                $region55: #{lenet_forward.4} parent=50 // loop_body
                  _
                $region56: #{lenet_forward.4} parent=50 // loop_footer
                  %s199 = sadd.s32 1, %s195
                $region57: #{lenet_forward.4} parent=50 // loop_footer_branch
                  %194 = sbr.rel target = $region53
                $region58: #{lenet_forward.4} parent=50 // loop_exit
                  _
                loop: start=0, step=1, limit=1
                $region59: #{lenet_forward.4} parent=50 // loop_pre_header
                  _
                $region60: #{lenet_forward.4} parent=50 // loop_header
                  %s204 = sphi 0, %s208
                  %p205 = scmp.ge.s32.totalorder %s204, 1
                  %s209 = sphi %s136, %s136
                  %s210 = sphi %s134, %s134
                $region61: #{lenet_forward.4} parent=50 // loop_header_branch
                  %207 = sbr.rel (%p205) target = $region65
                $region62: #{lenet_forward.4} parent=50 // loop_body
                  %v211 = vld [vmem:[%s209] sm:$0xf]
                  %212 = vst [vmem:[%s210] sm:$0xf] %v211
                  %v213 = vld [vmem:[%s209 + $0x8] sm:$0xf]
                  %214 = vst [vmem:[%s210 + $0x4] sm:$0xf] %v213
                  %v215 = vld [vmem:[%s209 + $0x10] sm:$0xf]
                  %216 = vst [vmem:[%s210 + $0x8] sm:$0xf] %v215
                  %v217 = vld [vmem:[%s209 + $0x18] sm:$0xf]
                  %218 = vst [vmem:[%s210 + $0xc] sm:$0xf] %v217
                  %v219 = vld [vmem:[%s209 + $0x20] sm:$0xf]
                  %220 = vst [vmem:[%s210 + $0x10] sm:$0xf] %v219
                  %v221 = vld [vmem:[%s209 + $0x28] sm:$0xf]
                  %222 = vst [vmem:[%s210 + $0x14] sm:$0xf] %v221
                  %v223 = vld [vmem:[%s209 + $0x30] sm:$0xf]
                  %224 = vst [vmem:[%s210 + $0x18] sm:$0xf] %v223
                  %v225 = vld [vmem:[%s209 + $0x38] sm:$0xf]
                  %226 = vst [vmem:[%s210 + $0x1c] sm:$0xf] %v225
                  %v227 = vld [vmem:[%s209 + $0x40] sm:$0xf]
                  %228 = vst [vmem:[%s210 + $0x20] sm:$0xf] %v227
                  %v229 = vld [vmem:[%s209 + $0x48] sm:$0xf]
                  %230 = vst [vmem:[%s210 + $0x24] sm:$0xf] %v229
                  %v231 = vld [vmem:[%s209 + $0x50] sm:$0xf]
                  %232 = vst [vmem:[%s210 + $0x28] sm:$0xf] %v231
                  %v233 = vld [vmem:[%s209 + $0x58] sm:$0xf]
                  %234 = vst [vmem:[%s210 + $0x2c] sm:$0xf] %v233
                  %v235 = vld [vmem:[%s209 + $0x60] sm:$0xf]
                  %236 = vst [vmem:[%s210 + $0x30] sm:$0xf] %v235
                  %v237 = vld [vmem:[%s209 + $0x68] sm:$0xf]
                  %238 = vst [vmem:[%s210 + $0x34] sm:$0xf] %v237
                  %v239 = vld [vmem:[%s209 + $0x70] sm:$0xf]
                  %240 = vst [vmem:[%s210 + $0x38] sm:$0xf] %v239
                  %v241 = vld [vmem:[%s209 + $0x78] sm:$0xf]
                  %242 = vst [vmem:[%s210 + $0x3c] sm:$0xf] %v241
                  %v243 = vld [vmem:[%s209 + $0x80] sm:$0xf]
                  %244 = vst [vmem:[%s210 + $0x40] sm:$0xf] %v243
                  %v245 = vld [vmem:[%s209 + $0x88] sm:$0xf]
                  %246 = vst [vmem:[%s210 + $0x44] sm:$0xf] %v245
                  %v247 = vld [vmem:[%s209 + $0x90] sm:$0xf]
                  %248 = vst [vmem:[%s210 + $0x48] sm:$0xf] %v247
                  %v249 = vld [vmem:[%s209 + $0x98] sm:$0xf]
                  %250 = vst [vmem:[%s210 + $0x4c] sm:$0xf] %v249
                $region63: #{lenet_forward.4} parent=50 // loop_footer
                  %s208 = sadd.s32 1, %s204
                $region64: #{lenet_forward.4} parent=50 // loop_footer_branch
                  %203 = sbr.rel target = $region60
                $region65: #{lenet_forward.4} parent=50 // loop_exit
                  _
              $region51: #{lenet_forward.4} parent=35 // pred_fallthru
                _
            $region36: #{lenet_forward.4} parent=31 // pred_fallthru
              _
            // Predicated region
            $region37: #{lenet_forward.4} parent=31 // pred_check
              _
            $region38: #{lenet_forward.4} parent=31 // pred_check_branch
              %142 = sbr.rel (0) target = $region40
            $region39: #{lenet_forward.4} parent=31 // pred_region
              loop: start=0, step=1, limit=1
              $region41: #{lenet_forward.4} parent=39 // loop_pre_header
                _
              $region42: #{lenet_forward.4} parent=39 // loop_header
                %s145 = sphi 0, %s149
                %p146 = scmp.ge.s32.totalorder %s145, 1
                %s150 = sphi %s136, %s136
                %s151 = sphi %s134, %s134
              $region43: #{lenet_forward.4} parent=39 // loop_header_branch
                %148 = sbr.rel (%p146) target = $region47
              $region44: #{lenet_forward.4} parent=39 // loop_body
                %v152 = vld [vmem:[%s150] sm:$0xf]
                %153 = vst [vmem:[%s151] sm:$0xf] %v152
                %v154 = vld [vmem:[%s150 + $0x8] sm:$0xf]
                %155 = vst [vmem:[%s151 + $0x4] sm:$0xf] %v154
                %v156 = vld [vmem:[%s150 + $0x10] sm:$0xf]
                %157 = vst [vmem:[%s151 + $0x8] sm:$0xf] %v156
                %v158 = vld [vmem:[%s150 + $0x18] sm:$0xf]
                %159 = vst [vmem:[%s151 + $0xc] sm:$0xf] %v158
                %v160 = vld [vmem:[%s150 + $0x20] sm:$0xf]
                %161 = vst [vmem:[%s151 + $0x10] sm:$0xf] %v160
                %v162 = vld [vmem:[%s150 + $0x28] sm:$0xf]
                %163 = vst [vmem:[%s151 + $0x14] sm:$0xf] %v162
                %v164 = vld [vmem:[%s150 + $0x30] sm:$0xf]
                %165 = vst [vmem:[%s151 + $0x18] sm:$0xf] %v164
                %v166 = vld [vmem:[%s150 + $0x38] sm:$0xf]
                %167 = vst [vmem:[%s151 + $0x1c] sm:$0xf] %v166
                %v168 = vld [vmem:[%s150 + $0x40] sm:$0xf]
                %169 = vst [vmem:[%s151 + $0x20] sm:$0xf] %v168
                %v170 = vld [vmem:[%s150 + $0x48] sm:$0xf]
                %171 = vst [vmem:[%s151 + $0x24] sm:$0xf] %v170
                %v172 = vld [vmem:[%s150 + $0x50] sm:$0xf]
                %173 = vst [vmem:[%s151 + $0x28] sm:$0xf] %v172
                %v174 = vld [vmem:[%s150 + $0x58] sm:$0xf]
                %175 = vst [vmem:[%s151 + $0x2c] sm:$0xf] %v174
                %v176 = vld [vmem:[%s150 + $0x60] sm:$0xf]
                %177 = vst [vmem:[%s151 + $0x30] sm:$0xf] %v176
                %v178 = vld [vmem:[%s150 + $0x68] sm:$0xf]
                %179 = vst [vmem:[%s151 + $0x34] sm:$0xf] %v178
                %v180 = vld [vmem:[%s150 + $0x70] sm:$0xf]
                %181 = vst [vmem:[%s151 + $0x38] sm:$0xf] %v180
                %v182 = vld [vmem:[%s150 + $0x78] sm:$0xf]
                %183 = vst [vmem:[%s151 + $0x3c] sm:$0xf] %v182
                %v184 = vld [vmem:[%s150 + $0x80] sm:$0xf]
                %185 = vst [vmem:[%s151 + $0x40] sm:$0xf] %v184
                %v186 = vld [vmem:[%s150 + $0x88] sm:$0xf]
                %187 = vst [vmem:[%s151 + $0x44] sm:$0xf] %v186
                %v188 = vld [vmem:[%s150 + $0x90] sm:$0xf]
                %189 = vst [vmem:[%s151 + $0x48] sm:$0xf] %v188
                %v190 = vld [vmem:[%s150 + $0x98] sm:$0xf]
                %191 = vst [vmem:[%s151 + $0x4c] sm:$0xf] %v190
              $region45: #{lenet_forward.4} parent=39 // loop_footer
                %s149 = sadd.s32 1, %s145
              $region46: #{lenet_forward.4} parent=39 // loop_footer_branch
                %144 = sbr.rel target = $region42
              $region47: #{lenet_forward.4} parent=39 // loop_exit
                _
            $region40: #{lenet_forward.4} parent=31 // pred_fallthru
              _
          $region32: #{lenet_forward.4} parent=27 // pred_fallthru
            _
          %251 = vnop
        $region28: #{lenet_forward.4} parent=23 // pred_fallthru
          _
      $region24: #{lenet_forward.4} parent=5 // pred_fallthru
        _
      %p252 = scmp.le.s32.totalorder 1, %s9
      %p253 = scmp.lt.s32.totalorder %s9, 3
      %p254 = pnand %p252, %p253
      %p255 = pneg %p254
      // Predicated region
      $region66: #{lenet_forward.4} parent=5 // pred_check
        _
      $region67: #{lenet_forward.4} parent=5 // pred_check_branch
        %257 = sbr.rel (%p254) target = $region69
      $region68: #{lenet_forward.4} parent=5 // pred_region
        %s258 = ssub.s32 %s9, 1
        %s259 = sand.u32 %s43, 1
        %s260 = sand.u32 %s43, 1
        %s261 = smul.addr %s260, 80
        %s262 = scalar_lea.vmem [#allocation2], %s261
        // Predicated region
        $region70: #{lenet_forward.4} parent=68 // pred_check
          %p263 = pneg %p56
        $region71: #{lenet_forward.4} parent=68 // pred_check_branch
          %265 = sbr.rel (%p263) target = $region73
        $region72: #{lenet_forward.4} parent=68 // pred_region
          _
        $region73: #{lenet_forward.4} parent=68 // pred_fallthru
          _
        %p266 = pneg %p30
        %p267 = pneg %p27
        %s268 = sand.u32 %s43, 1
        %s269 = sand.u32 %s43, 1
        %s270 = smul.addr %s269, 80
        %s271 = scalar_lea.vmem [#allocation2], %s270
        %p272 = pneg %p56
        %p273 = pneg %p53
        %p274 = pneg %p77
        %p275 = pneg %p74
        %p276 = pneg %p103
        %p277 = pneg %p100
        %s278 = sand.u32 %s90, 1
        %s279 = sand.u32 %s90, 1
        %s280 = smul.addr %s279, 8
        %s281 = scalar_lea.vmem [#allocation3], %s280
        %v283 = vld [vmem:[%s0] sm:$0xff]
        %v284 = vld [vmem:[%s0 + $0x8] sm:$0xff]
        %v285 = vld [vmem:[%s262] sm:$0xf]
        %v286 = vld [vmem:[%s262 + $0x4] sm:$0xf]
        %v287 = vld [vmem:[%s262 + $0x8] sm:$0xf]
        %v288 = vld [vmem:[%s262 + $0xc] sm:$0xf]
        %v289 = vld [vmem:[%s262 + $0x10] sm:$0xf]
        %v290 = vld [vmem:[%s262 + $0x14] sm:$0xf]
        %v291 = vld [vmem:[%s262 + $0x18] sm:$0xf]
        %v292 = vld [vmem:[%s262 + $0x1c] sm:$0xf]
        %v293 = vld [vmem:[%s262 + $0x20] sm:$0xf]
        %v294 = vld [vmem:[%s262 + $0x24] sm:$0xf]
        %v295 = vld [vmem:[%s262 + $0x28] sm:$0xf]
        %v296 = vld [vmem:[%s262 + $0x2c] sm:$0xf]
        %v297 = vld [vmem:[%s262 + $0x30] sm:$0xf]
        %v298 = vld [vmem:[%s262 + $0x34] sm:$0xf]
        %v299 = vld [vmem:[%s262 + $0x38] sm:$0xf]
        %v300 = vld [vmem:[%s262 + $0x3c] sm:$0xf]
        %v301 = vld [vmem:[%s262 + $0x40] sm:$0xf]
        %v302 = vld [vmem:[%s262 + $0x44] sm:$0xf]
        %v303 = vld [vmem:[%s262 + $0x48] sm:$0xf]
        %v304 = vld [vmem:[%s262 + $0x4c] sm:$0xf]
        %v305 = vld [vmem:[%s2] sm:$0xff]
        %v306 = vld [vmem:[%s2 + $0x8] sm:$0xff]
        %308 = vset.pattern.permute.xlu0 0
        %309 = vperm.xlu0 %308, %v305
        %v310 = vpop.permute.xlu0 %309
        %313 = vset.pattern.permute.xlu0 0
        %314 = vperm.xlu0 %313, %v306
        %v315 = vpop.permute.xlu0 %314
        %v319 = vunpack.c.l.b16 %v283
        %v320 = vunpack.c.h.b16 %v283
        %v321 = vunpack.c.l.b16 %v284
        %v322 = vunpack.c.h.b16 %v284
        %v323 = vpack.c.b16 %v321, %v319
        %v324 = vpack.c.b16 %v322, %v320
        %v346 = vunpack.c.l.b16 %v285
        %v347 = vunpack.c.l.b16 %v286
        %v348 = vunpack.c.l.b16 %v287
        %v349 = vunpack.c.l.b16 %v288
        %v350 = vunpack.c.l.b16 %v289
        %v351 = vunpack.c.l.b16 %v290
        %v352 = vunpack.c.l.b16 %v291
        %v353 = vunpack.c.l.b16 %v292
        %v354 = vunpack.c.l.b16 %v293
        %v355 = vunpack.c.l.b16 %v294
        %v356 = vunpack.c.l.b16 %v295
        %v357 = vunpack.c.l.b16 %v296
        %v358 = vunpack.c.l.b16 %v297
        %v359 = vunpack.c.l.b16 %v298
        %v360 = vunpack.c.l.b16 %v299
        %v361 = vunpack.c.l.b16 %v300
        %v362 = vunpack.c.l.b16 %v301
        %v363 = vunpack.c.l.b16 %v302
        %v364 = vunpack.c.l.b16 %v303
        %v365 = vunpack.c.l.b16 %v304
        %v366 = vpack.c.b16 %v347, %v346
        %v367 = vpack.c.b16 %v349, %v348
        %v368 = vpack.c.b16 %v351, %v350
        %v369 = vpack.c.b16 %v353, %v352
        %v370 = vpack.c.b16 %v355, %v354
        %v371 = vpack.c.b16 %v357, %v356
        %v372 = vpack.c.b16 %v359, %v358
        %v373 = vpack.c.b16 %v361, %v360
        %v374 = vpack.c.b16 %v363, %v362
        %v375 = vpack.c.b16 %v365, %v364
        %vm386 = vcmask 261120
        %v388 = vsel %vm386, %v324, 0
        %390 = vmatprep.subr.bf16.mxu0 0
        %391 = vmatpush1.bf16.msra.mxu0 %v366
        %392 = vmatprep.subr.bf16.mxu0 0
        %393 = vmatpush1.bf16.msra.mxu0 %v367
        %394 = vmatprep.subr.bf16.mxu0 0
        %395 = vmatpush1.bf16.msra.mxu0 %v368
        %396 = vmatprep.subr.bf16.mxu0 0
        %397 = vmatpush1.bf16.msra.mxu0 %v369
        %398 = vmatprep.subr.bf16.mxu0 0
        %399 = vmatpush1.bf16.msra.mxu0 %v370
        %400 = vmatprep.subr.bf16.mxu0 0
        %401 = vmatpush1.bf16.msra.mxu0 %v371
        %402 = vmatprep.subr.bf16.mxu0 0
        %403 = vmatpush1.bf16.msra.mxu0 %v372
        %404 = vmatprep.subr.bf16.mxu0 0
        %405 = vmatpush1.bf16.msra.mxu0 %v373
        %406 = vmatprep.subr.bf16.mxu0 0
        %407 = vmatpush1.bf16.msra.mxu0 %v374
        %408 = vmatprep.subr.bf16.mxu0 0
        %409 = vmatpush1.bf16.msra.mxu0 %v375
        %410 = vmatprep.subr.bf16.mxu0 0
        %411 = vmatpush1.bf16.msra.mxu0 0
        %412 = vmatprep.subr.bf16.mxu0 0
        %413 = vmatpush1.bf16.msra.mxu0 0
        %414 = vmatprep.subr.bf16.mxu0 0
        %415 = vmatpush1.bf16.msra.mxu0 0
        %416 = vmatprep.subr.bf16.mxu0 0
        %417 = vmatpush1.bf16.msra.mxu0 0
        %418 = vmatprep.subr.bf16.mxu0 0
        %419 = vmatpush1.bf16.msra.mxu0 0
        %420 = vmatprep.subr.bf16.mxu0 0
        %421 = vmatpush1.bf16.msra.mxu0 0
        %422 = vmatprep.mubr.bf16.mxu0 %v388
        %423 = vmatmul.mubr.bf16.gmra.mrb[0].mxu0 %v323
        %v424 = vpop.f32.mrb[0].mxu0
        %v425 = vadd.f32 %v310, %v424
        %v426 = vpop.f32.mrb[0].mxu0
        %v427 = vpop.f32.mrb[0].mxu0
        %v428 = vadd.f32 %v315, %v427
        %v429 = vpop.f32.mrb[0].mxu0
        %430 = vdwg.mxu0
        %v431 = vmax.f32 %v425, 0.0
        %v432 = vmax.f32 %v428, 0.0
        %v433 = vpack.c.bf16 %v432, %v431
        %v435 = vunpack.c.l.b16 %v433
        %v436 = vunpack.c.h.b16 %v433
        %v437 = vpack.c.b16 %v435, %v435
        %v438 = vpack.c.b16 %v436, %v436
        %441 = vst [vmem:[%s281] sm:$0xf] %v437
        %442 = vst [vmem:[%s281 + $0x4] sm:$0xf] %v438
        %s443 = sand.u32 %s90, 1
        %s444 = sand.u32 %s90, 1
        %s445 = smul.addr %s444, 8
        %s446 = scalar_lea.vmem [#allocation3], %s445
        // Predicated region
        $region74: #{lenet_forward.4} parent=68 // pred_check
          %p447 = pneg %p100
        $region75: #{lenet_forward.4} parent=68 // pred_check_branch
          %449 = sbr.rel (%p447) target = $region77
        $region76: #{lenet_forward.4} parent=68 // pred_region
          %s450 = smul.addr %s14, 4
          %s451 = scalar_lea.vmem %s3, %s450
          // Predicated region
          $region78: #{lenet_forward.4} parent=76 // pred_check
            _
          $region79: #{lenet_forward.4} parent=76 // pred_check_branch
            %453 = sbr.rel (0) target = $region81
          $region80: #{lenet_forward.4} parent=76 // pred_region
            // Predicated region
            $region82: #{lenet_forward.4} parent=80 // pred_check
              _
            $region83: #{lenet_forward.4} parent=80 // pred_check_branch
              %455 = sbr.rel target = $region85
            $region84: #{lenet_forward.4} parent=80 // pred_region
              // Predicated region
              $region97: #{lenet_forward.4} parent=84 // pred_check
                _
              $region98: #{lenet_forward.4} parent=84 // pred_check_branch
                %472 = sbr.rel (0) target = $region100
              $region99: #{lenet_forward.4} parent=84 // pred_region
                loop: start=0, step=1, limit=1
                $region101: #{lenet_forward.4} parent=99 // loop_pre_header
                  _
                $region102: #{lenet_forward.4} parent=99 // loop_header
                  %s474 = sphi 0, %s478
                  %p475 = scmp.ge.s32.totalorder %s474, 1
                  %s479 = sphi %s446, %s446
                  %s480 = sphi %s451, %s451
                $region103: #{lenet_forward.4} parent=99 // loop_header_branch
                  %477 = sbr.rel (%p475) target = $region107
                $region104: #{lenet_forward.4} parent=99 // loop_body
                  _
                $region105: #{lenet_forward.4} parent=99 // loop_footer
                  %s478 = sadd.s32 1, %s474
                $region106: #{lenet_forward.4} parent=99 // loop_footer_branch
                  %473 = sbr.rel target = $region102
                $region107: #{lenet_forward.4} parent=99 // loop_exit
                  _
                loop: start=0, step=1, limit=1
                $region108: #{lenet_forward.4} parent=99 // loop_pre_header
                  _
                $region109: #{lenet_forward.4} parent=99 // loop_header
                  %s483 = sphi 0, %s487
                  %p484 = scmp.ge.s32.totalorder %s483, 1
                  %s488 = sphi %s446, %s446
                  %s489 = sphi %s451, %s451
                $region110: #{lenet_forward.4} parent=99 // loop_header_branch
                  %486 = sbr.rel (%p484) target = $region114
                $region111: #{lenet_forward.4} parent=99 // loop_body
                  %v490 = vld [vmem:[%s488] sm:$0xf]
                  %491 = vst [vmem:[%s489] sm:$0xf] %v490
                  %v492 = vld [vmem:[%s488 + $0x4] sm:$0xf]
                  %493 = vst [vmem:[%s489 + $0x8] sm:$0xf] %v492
                $region112: #{lenet_forward.4} parent=99 // loop_footer
                  %s487 = sadd.s32 1, %s483
                $region113: #{lenet_forward.4} parent=99 // loop_footer_branch
                  %482 = sbr.rel target = $region109
                $region114: #{lenet_forward.4} parent=99 // loop_exit
                  _
              $region100: #{lenet_forward.4} parent=84 // pred_fallthru
                _
            $region85: #{lenet_forward.4} parent=80 // pred_fallthru
              _
            // Predicated region
            $region86: #{lenet_forward.4} parent=80 // pred_check
              _
            $region87: #{lenet_forward.4} parent=80 // pred_check_branch
              %457 = sbr.rel (0) target = $region89
            $region88: #{lenet_forward.4} parent=80 // pred_region
              loop: start=0, step=1, limit=1
              $region90: #{lenet_forward.4} parent=88 // loop_pre_header
                _
              $region91: #{lenet_forward.4} parent=88 // loop_header
                %s460 = sphi 0, %s464
                %p461 = scmp.ge.s32.totalorder %s460, 1
                %s465 = sphi %s446, %s446
                %s466 = sphi %s451, %s451
              $region92: #{lenet_forward.4} parent=88 // loop_header_branch
                %463 = sbr.rel (%p461) target = $region96
              $region93: #{lenet_forward.4} parent=88 // loop_body
                %v467 = vld [vmem:[%s465] sm:$0xf]
                %468 = vst [vmem:[%s466] sm:$0xf] %v467
                %v469 = vld [vmem:[%s465 + $0x4] sm:$0xf]
                %470 = vst [vmem:[%s466 + $0x8] sm:$0xf] %v469
              $region94: #{lenet_forward.4} parent=88 // loop_footer
                %s464 = sadd.s32 1, %s460
              $region95: #{lenet_forward.4} parent=88 // loop_footer_branch
                %459 = sbr.rel target = $region91
              $region96: #{lenet_forward.4} parent=88 // loop_exit
                _
            $region89: #{lenet_forward.4} parent=80 // pred_fallthru
              _
          $region81: #{lenet_forward.4} parent=76 // pred_fallthru
            _
          %494 = vnop
        $region77: #{lenet_forward.4} parent=68 // pred_fallthru
          _
      $region69: #{lenet_forward.4} parent=5 // pred_fallthru
        _
      %p495 = scmp.le.s32.totalorder 2, %s9
      // Predicated region
      $region115: #{lenet_forward.4} parent=5 // pred_check
        %p496 = pneg %p495
      $region116: #{lenet_forward.4} parent=5 // pred_check_branch
        %498 = sbr.rel (%p496) target = $region118
      $region117: #{lenet_forward.4} parent=5 // pred_region
        %s499 = ssub.s32 %s9, 2
        // Predicated region
        $region119: #{lenet_forward.4} parent=117 // pred_check
          %p500 = pneg %p106
        $region120: #{lenet_forward.4} parent=117 // pred_check_branch
          %502 = sbr.rel (%p500) target = $region122
        $region121: #{lenet_forward.4} parent=117 // pred_region
          %s503 = sand.u32 %s91, 1
          %s504 = sand.u32 %s91, 1
          %s505 = smul.addr %s504, 8
          %s506 = scalar_lea.vmem [#allocation3], %s505
        $region122: #{lenet_forward.4} parent=117 // pred_fallthru
          _
      $region118: #{lenet_forward.4} parent=5 // pred_fallthru
        _
    $region6: #{lenet_forward.4} parent=1 // loop_footer
      %s13 = sadd.s32 1, %s9
    $region7: #{lenet_forward.4} parent=1 // loop_footer_branch
      %8 = sbr.rel target = $region3
    $region8: #{lenet_forward.4} parent=1 // loop_exit
      _

// kernel: lenet_forward.5
$region0: #{lenet_forward.5}
  #allocation0 [shape = 'u32[]', space=smem, size = 0x4, offset = 0x4, fixed_abs, tag = 'smem constant byte address 0x4 - core index']
  #allocation1 [shape = 'u32[144,128]{1,0:T(1,128)}', space=vmem, size = 0x12000, scoped, tag = 'internal scratch']
  %s0 = inlined_call_operand.vmem [shape: bf16[8,400], index: 0, kind: input, shape index: {}]
  %s1 = inlined_call_operand.vmem [shape: bf16[400,128], index: 1, kind: input, shape index: {}]
  %s2 = inlined_call_operand.vmem [shape: f32[1,128], index: 2, kind: input, shape index: {}]
  %s3 = inlined_call_operand.vmem [shape: bf16[128,128], index: 3, kind: input, shape index: {}]
  %s4 = inlined_call_operand.vmem [shape: f32[1,128], index: 4, kind: input, shape index: {}]
  %s5 = inlined_call_operand.vmem [shape: bf16[128,128], index: 5, kind: input, shape index: {}]
  %s6 = inlined_call_operand.vmem [shape: f32[1,128], index: 6, kind: input, shape index: {}]
  %s7 = inlined_call_operand.vmem [shape: f32[8,128], index: 7, kind: output, shape index: {}]
  %s8 = sld [smem:[#allocation0]]
  $region38: #{lenet_forward.5} parent=0
    _
  %s10 = ssub.s32 1, %s8
  %s11 = scalar_select 0, %s10, %s8
  // Predicated region
  $region2: #{lenet_forward.5} parent=0 // pred_check
    _
  $region3: #{lenet_forward.5} parent=0 // pred_check_branch
    %13 = sbr.rel (0) target = $region5
  $region4: #{lenet_forward.5} parent=0 // pred_region
    _
  $region5: #{lenet_forward.5} parent=0 // pred_fallthru
    _
  // Predicated region
  $region6: #{lenet_forward.5} parent=0 // pred_check
    _
  $region7: #{lenet_forward.5} parent=0 // pred_check_branch
    %15 = sbr.rel (0) target = $region9
  $region8: #{lenet_forward.5} parent=0 // pred_region
    _
  $region9: #{lenet_forward.5} parent=0 // pred_fallthru
    _
  // Predicated region
  $region10: #{lenet_forward.5} parent=0 // pred_check
    _
  $region11: #{lenet_forward.5} parent=0 // pred_check_branch
    %17 = sbr.rel (0) target = $region13
  $region12: #{lenet_forward.5} parent=0 // pred_region
    _
  $region13: #{lenet_forward.5} parent=0 // pred_fallthru
    _
  // Predicated region
  $region14: #{lenet_forward.5} parent=0 // pred_check
    _
  $region15: #{lenet_forward.5} parent=0 // pred_check_branch
    %19 = sbr.rel (0) target = $region17
  $region16: #{lenet_forward.5} parent=0 // pred_region
    _
  $region17: #{lenet_forward.5} parent=0 // pred_fallthru
    _
  // Predicated region
  $region18: #{lenet_forward.5} parent=0 // pred_check
    _
  $region19: #{lenet_forward.5} parent=0 // pred_check_branch
    %21 = sbr.rel (0) target = $region21
  $region20: #{lenet_forward.5} parent=0 // pred_region
    _
  $region21: #{lenet_forward.5} parent=0 // pred_fallthru
    _
  // Predicated region
  $region22: #{lenet_forward.5} parent=0 // pred_check
    _
  $region23: #{lenet_forward.5} parent=0 // pred_check_branch
    %23 = sbr.rel (0) target = $region25
  $region24: #{lenet_forward.5} parent=0 // pred_region
    _
  $region25: #{lenet_forward.5} parent=0 // pred_fallthru
    _
  // Predicated region
  $region26: #{lenet_forward.5} parent=0 // pred_check
    _
  $region27: #{lenet_forward.5} parent=0 // pred_check_branch
    %25 = sbr.rel (0) target = $region29
  $region28: #{lenet_forward.5} parent=0 // pred_region
    _
  $region29: #{lenet_forward.5} parent=0 // pred_fallthru
    _
  %v27 = vld [vmem:[%s0] sm:$0xff]
  %v28 = vld [vmem:[%s0 + $0x8] sm:$0xff]
  %v29 = vld [vmem:[%s1] sm:$0xf]
  %v30 = vld [vmem:[%s1 + $0x4] sm:$0xf]
  %v31 = vld [vmem:[%s1 + $0x8] sm:$0xf]
  %v32 = vld [vmem:[%s1 + $0xc] sm:$0xf]
  %v33 = vld [vmem:[%s1 + $0x10] sm:$0xf]
  %v34 = vld [vmem:[%s1 + $0x14] sm:$0xf]
  %v35 = vld [vmem:[%s1 + $0x18] sm:$0xf]
  %v36 = vld [vmem:[%s1 + $0x1c] sm:$0xf]
  %v37 = vld [vmem:[%s1 + $0x20] sm:$0xf]
  %v38 = vld [vmem:[%s1 + $0x24] sm:$0xf]
  %v39 = vld [vmem:[%s1 + $0x28] sm:$0xf]
  %v40 = vld [vmem:[%s1 + $0x2c] sm:$0xf]
  %v41 = vld [vmem:[%s1 + $0x30] sm:$0xf]
  %v42 = vld [vmem:[%s1 + $0x34] sm:$0xf]
  %v43 = vld [vmem:[%s1 + $0x38] sm:$0xf]
  %v44 = vld [vmem:[%s1 + $0x3c] sm:$0xf]
  %v45 = vld [vmem:[%s1 + $0x40] sm:$0xf]
  %v46 = vld [vmem:[%s1 + $0x44] sm:$0xf]
  %v47 = vld [vmem:[%s1 + $0x48] sm:$0xf]
  %v48 = vld [vmem:[%s1 + $0x4c] sm:$0xf]
  %v49 = vld [vmem:[%s1 + $0x50] sm:$0xf]
  %v50 = vld [vmem:[%s1 + $0x54] sm:$0xf]
  %v51 = vld [vmem:[%s1 + $0x58] sm:$0xf]
  %v52 = vld [vmem:[%s1 + $0x5c] sm:$0xf]
  %v53 = vld [vmem:[%s1 + $0x60] sm:$0xf]
  %v54 = vld [vmem:[%s1 + $0x64] sm:$0xf]
  %v55 = vld [vmem:[%s1 + $0x68] sm:$0xf]
  %v56 = vld [vmem:[%s1 + $0x6c] sm:$0xf]
  %v57 = vld [vmem:[%s1 + $0x70] sm:$0xf]
  %v58 = vld [vmem:[%s1 + $0x74] sm:$0xf]
  %v59 = vld [vmem:[%s1 + $0x78] sm:$0xf]
  %v60 = vld [vmem:[%s1 + $0x7c] sm:$0xf]
  %v61 = vld [vmem:[%s1 + $0x80] sm:$0xf]
  %v62 = vld [vmem:[%s1 + $0x84] sm:$0xf]
  %v63 = vld [vmem:[%s1 + $0x88] sm:$0xf]
  %v64 = vld [vmem:[%s1 + $0x8c] sm:$0xf]
  %v65 = vld [vmem:[%s1 + $0x90] sm:$0xf]
  %v66 = vld [vmem:[%s1 + $0x94] sm:$0xf]
  %v67 = vld [vmem:[%s1 + $0x98] sm:$0xf]
  %v68 = vld [vmem:[%s1 + $0x9c] sm:$0xf]
  %v69 = vld [vmem:[%s1 + $0xa0] sm:$0xf]
  %v70 = vld [vmem:[%s1 + $0xa4] sm:$0xf]
  %v71 = vld [vmem:[%s1 + $0xa8] sm:$0xf]
  %v72 = vld [vmem:[%s1 + $0xac] sm:$0xf]
  %v73 = vld [vmem:[%s1 + $0xb0] sm:$0xf]
  %v74 = vld [vmem:[%s1 + $0xb4] sm:$0xf]
  %v75 = vld [vmem:[%s1 + $0xb8] sm:$0xf]
  %v76 = vld [vmem:[%s1 + $0xbc] sm:$0xf]
  %v77 = vld [vmem:[%s1 + $0xc0] sm:$0xf]
  %v78 = vld [vmem:[%s1 + $0xc4] sm:$0xf]
  %v79 = vld [vmem:[%s2] sm:$0x1]
  %v81 = vlaneseq
  %v82 = vshrl.u32 %v81, 7
  %v83 = vsub.s32 0, %v82
  %v84 = vrot.slane %v79, %v83
  %v88 = vunpack.c.l.b16 %v27
  %v89 = vunpack.c.h.b16 %v27
  %v90 = vunpack.c.l.b16 %v28
  %v91 = vunpack.c.h.b16 %v28
  %v92 = vpack.c.b16 %v88, %v88
  %v93 = vpack.c.b16 %v89, %v89
  %v94 = vpack.c.b16 %v90, %v90
  %v95 = vpack.c.b16 %v91, %v91
  %v149 = vunpack.c.l.b16 %v29
  %v150 = vunpack.c.l.b16 %v30
  %v151 = vunpack.c.l.b16 %v31
  %v152 = vunpack.c.l.b16 %v32
  %v153 = vunpack.c.l.b16 %v33
  %v154 = vunpack.c.l.b16 %v34
  %v155 = vunpack.c.l.b16 %v35
  %v156 = vunpack.c.l.b16 %v36
  %v157 = vunpack.c.l.b16 %v37
  %v158 = vunpack.c.l.b16 %v38
  %v159 = vunpack.c.l.b16 %v39
  %v160 = vunpack.c.l.b16 %v40
  %v161 = vunpack.c.l.b16 %v41
  %v162 = vunpack.c.l.b16 %v42
  %v163 = vunpack.c.l.b16 %v43
  %v164 = vunpack.c.l.b16 %v44
  %v165 = vunpack.c.l.b16 %v45
  %v166 = vunpack.c.l.b16 %v46
  %v167 = vunpack.c.l.b16 %v47
  %v168 = vunpack.c.l.b16 %v48
  %v169 = vunpack.c.l.b16 %v49
  %v170 = vunpack.c.l.b16 %v50
  %v171 = vunpack.c.l.b16 %v51
  %v172 = vunpack.c.l.b16 %v52
  %v173 = vunpack.c.l.b16 %v53
  %v174 = vunpack.c.l.b16 %v54
  %v175 = vunpack.c.l.b16 %v55
  %v176 = vunpack.c.l.b16 %v56
  %v177 = vunpack.c.l.b16 %v57
  %v178 = vunpack.c.l.b16 %v58
  %v179 = vunpack.c.l.b16 %v59
  %v180 = vunpack.c.l.b16 %v60
  %v181 = vunpack.c.l.b16 %v61
  %v182 = vunpack.c.l.b16 %v62
  %v183 = vunpack.c.l.b16 %v63
  %v184 = vunpack.c.l.b16 %v64
  %v185 = vunpack.c.l.b16 %v65
  %v186 = vunpack.c.l.b16 %v66
  %v187 = vunpack.c.l.b16 %v67
  %v188 = vunpack.c.l.b16 %v68
  %v189 = vunpack.c.l.b16 %v69
  %v190 = vunpack.c.l.b16 %v70
  %v191 = vunpack.c.l.b16 %v71
  %v192 = vunpack.c.l.b16 %v72
  %v193 = vunpack.c.l.b16 %v73
  %v194 = vunpack.c.l.b16 %v74
  %v195 = vunpack.c.l.b16 %v75
  %v196 = vunpack.c.l.b16 %v76
  %v197 = vunpack.c.l.b16 %v77
  %v198 = vunpack.c.l.b16 %v78
  %v199 = vpack.c.b16 %v150, %v149
  %v200 = vpack.c.b16 %v152, %v151
  %v201 = vpack.c.b16 %v154, %v153
  %v202 = vpack.c.b16 %v156, %v155
  %v203 = vpack.c.b16 %v158, %v157
  %v204 = vpack.c.b16 %v160, %v159
  %v205 = vpack.c.b16 %v162, %v161
  %v206 = vpack.c.b16 %v164, %v163
  %v207 = vpack.c.b16 %v166, %v165
  %v208 = vpack.c.b16 %v168, %v167
  %v209 = vpack.c.b16 %v170, %v169
  %v210 = vpack.c.b16 %v172, %v171
  %v211 = vpack.c.b16 %v174, %v173
  %v212 = vpack.c.b16 %v176, %v175
  %v213 = vpack.c.b16 %v178, %v177
  %v214 = vpack.c.b16 %v180, %v179
  %v215 = vpack.c.b16 %v182, %v181
  %v216 = vpack.c.b16 %v184, %v183
  %v217 = vpack.c.b16 %v186, %v185
  %v218 = vpack.c.b16 %v188, %v187
  %v219 = vpack.c.b16 %v190, %v189
  %v220 = vpack.c.b16 %v192, %v191
  %v221 = vpack.c.b16 %v194, %v193
  %v222 = vpack.c.b16 %v196, %v195
  %v223 = vpack.c.b16 %v198, %v197
  %vm249 = vcmask 130048
  %v251 = vsel %vm249, %v95, 0
  %253 = vmatprep.subr.bf16.mxu0 0
  %254 = vmatpush1.bf16.msra.mxu0 %v199
  %255 = vmatprep.subr.bf16.mxu0 0
  %256 = vmatpush1.bf16.msra.mxu0 %v200
  %257 = vmatprep.subr.bf16.mxu0 0
  %258 = vmatpush1.bf16.msra.mxu0 %v201
  %259 = vmatprep.subr.bf16.mxu0 0
  %260 = vmatpush1.bf16.msra.mxu0 %v202
  %261 = vmatprep.subr.bf16.mxu0 0
  %262 = vmatpush1.bf16.msra.mxu0 %v203
  %263 = vmatprep.subr.bf16.mxu0 0
  %264 = vmatpush1.bf16.msra.mxu0 %v204
  %265 = vmatprep.subr.bf16.mxu0 0
  %266 = vmatpush1.bf16.msra.mxu0 %v205
  %267 = vmatprep.subr.bf16.mxu0 0
  %268 = vmatpush1.bf16.msra.mxu0 %v206
  %269 = vmatprep.subr.bf16.mxu0 0
  %270 = vmatpush1.bf16.msra.mxu0 %v207
  %271 = vmatprep.subr.bf16.mxu0 0
  %272 = vmatpush1.bf16.msra.mxu0 %v208
  %273 = vmatprep.subr.bf16.mxu0 0
  %274 = vmatpush1.bf16.msra.mxu0 %v209
  %275 = vmatprep.subr.bf16.mxu0 0
  %276 = vmatpush1.bf16.msra.mxu0 %v210
  %277 = vmatprep.subr.bf16.mxu0 0
  %278 = vmatpush1.bf16.msra.mxu0 %v211
  %279 = vmatprep.subr.bf16.mxu0 0
  %280 = vmatpush1.bf16.msra.mxu0 %v212
  %281 = vmatprep.subr.bf16.mxu0 0
  %282 = vmatpush1.bf16.msra.mxu0 %v213
  %283 = vmatprep.subr.bf16.mxu0 0
  %284 = vmatpush1.bf16.msra.mxu0 %v214
  %285 = vmatprep.mubr.bf16.mxu0 %v93
  %286 = vmatmul.mubr.bf16.gmra.mrb[0].mxu0 %v92
  %v287 = vpop.f32.mrb[0].mxu0
  %v288 = vadd.f32 %v84, %v287
  %v289 = vpop.f32.mrb[0].mxu0
  %v290 = vpop.f32.mrb[0].mxu0
  %v291 = vpop.f32.mrb[0].mxu0
  %292 = vdwg.mxu0
  %293 = vmatprep.subr.bf16.mxu0 0
  %294 = vmatpush1.bf16.msra.mxu0 %v215
  %295 = vmatprep.subr.bf16.mxu0 0
  %296 = vmatpush1.bf16.msra.mxu0 %v216
  %297 = vmatprep.subr.bf16.mxu0 0
  %298 = vmatpush1.bf16.msra.mxu0 %v217
  %299 = vmatprep.subr.bf16.mxu0 0
  %300 = vmatpush1.bf16.msra.mxu0 %v218
  %301 = vmatprep.subr.bf16.mxu0 0
  %302 = vmatpush1.bf16.msra.mxu0 %v219
  %303 = vmatprep.subr.bf16.mxu0 0
  %304 = vmatpush1.bf16.msra.mxu0 %v220
  %305 = vmatprep.subr.bf16.mxu0 0
  %306 = vmatpush1.bf16.msra.mxu0 %v221
  %307 = vmatprep.subr.bf16.mxu0 0
  %308 = vmatpush1.bf16.msra.mxu0 %v222
  %309 = vmatprep.subr.bf16.mxu0 0
  %310 = vmatpush1.bf16.msra.mxu0 %v223
  %311 = vmatprep.subr.bf16.mxu0 0
  %312 = vmatpush1.bf16.msra.mxu0 0
  %313 = vmatprep.subr.bf16.mxu0 0
  %314 = vmatpush1.bf16.msra.mxu0 0
  %315 = vmatprep.subr.bf16.mxu0 0
  %316 = vmatpush1.bf16.msra.mxu0 0
  %317 = vmatprep.subr.bf16.mxu0 0
  %318 = vmatpush1.bf16.msra.mxu0 0
  %319 = vmatprep.subr.bf16.mxu0 0
  %320 = vmatpush1.bf16.msra.mxu0 0
  %321 = vmatprep.subr.bf16.mxu0 0
  %322 = vmatpush1.bf16.msra.mxu0 0
  %323 = vmatprep.subr.bf16.mxu0 0
  %324 = vmatpush1.bf16.msra.mxu0 0
  %325 = vmatprep.mubr.bf16.mxu0 %v251
  %326 = vmatmul.mubr.bf16.gmra.mrb[0].mxu0 %v94
  %v327 = vpop.f32.mrb[0].mxu0
  %v328 = vadd.f32 %v288, %v327
  %v329 = vpop.f32.mrb[0].mxu0
  %v330 = vpop.f32.mrb[0].mxu0
  %v331 = vpop.f32.mrb[0].mxu0
  %332 = vdwg.mxu0
  %v333 = vmax.f32 %v328, 0.0
  %v334 = vpack.c.bf16 %v333, %v333
  %v335 = vld [vmem:[%s3] sm:$0xf]
  %v336 = vld [vmem:[%s3 + $0x4] sm:$0xf]
  %v337 = vld [vmem:[%s3 + $0x8] sm:$0xf]
  %v338 = vld [vmem:[%s3 + $0xc] sm:$0xf]
  %v339 = vld [vmem:[%s3 + $0x10] sm:$0xf]
  %v340 = vld [vmem:[%s3 + $0x14] sm:$0xf]
  %v341 = vld [vmem:[%s3 + $0x18] sm:$0xf]
  %v342 = vld [vmem:[%s3 + $0x1c] sm:$0xf]
  %v343 = vld [vmem:[%s3 + $0x20] sm:$0xf]
  %v344 = vld [vmem:[%s3 + $0x24] sm:$0xf]
  %v345 = vld [vmem:[%s3 + $0x28] sm:$0xf]
  %v346 = vld [vmem:[%s3 + $0x2c] sm:$0xf]
  %v347 = vld [vmem:[%s3 + $0x30] sm:$0xf]
  %v348 = vld [vmem:[%s3 + $0x34] sm:$0xf]
  %v349 = vld [vmem:[%s3 + $0x38] sm:$0xf]
  %v350 = vld [vmem:[%s3 + $0x3c] sm:$0xf]
  %v351 = vld [vmem:[%s4] sm:$0x1]
  %v353 = vlaneseq
  %v354 = vshrl.u32 %v353, 7
  %v355 = vsub.s32 0, %v354
  %v356 = vrot.slane %v351, %v355
  %v374 = vunpack.c.l.b16 %v335
  %v375 = vunpack.c.l.b16 %v336
  %v376 = vunpack.c.l.b16 %v337
  %v377 = vunpack.c.l.b16 %v338
  %v378 = vunpack.c.l.b16 %v339
  %v379 = vunpack.c.l.b16 %v340
  %v380 = vunpack.c.l.b16 %v341
  %v381 = vunpack.c.l.b16 %v342
  %v382 = vunpack.c.l.b16 %v343
  %v383 = vunpack.c.l.b16 %v344
  %v384 = vunpack.c.l.b16 %v345
  %v385 = vunpack.c.l.b16 %v346
  %v386 = vunpack.c.l.b16 %v347
  %v387 = vunpack.c.l.b16 %v348
  %v388 = vunpack.c.l.b16 %v349
  %v389 = vunpack.c.l.b16 %v350
  %v390 = vpack.c.b16 %v375, %v374
  %v391 = vpack.c.b16 %v377, %v376
  %v392 = vpack.c.b16 %v379, %v378
  %v393 = vpack.c.b16 %v381, %v380
  %v394 = vpack.c.b16 %v383, %v382
  %v395 = vpack.c.b16 %v385, %v384
  %v396 = vpack.c.b16 %v387, %v386
  %v397 = vpack.c.b16 %v389, %v388
  %406 = vmatprep.subr.bf16.mxu0 0
  %407 = vmatpush1.bf16.msra.mxu0 %v390
  %408 = vmatprep.subr.bf16.mxu0 0
  %409 = vmatpush1.bf16.msra.mxu0 %v391
  %410 = vmatprep.subr.bf16.mxu0 0
  %411 = vmatpush1.bf16.msra.mxu0 %v392
  %412 = vmatprep.subr.bf16.mxu0 0
  %413 = vmatpush1.bf16.msra.mxu0 %v393
  %414 = vmatprep.subr.bf16.mxu0 0
  %415 = vmatpush1.bf16.msra.mxu0 %v394
  %416 = vmatprep.subr.bf16.mxu0 0
  %417 = vmatpush1.bf16.msra.mxu0 %v395
  %418 = vmatprep.subr.bf16.mxu0 0
  %419 = vmatpush1.bf16.msra.mxu0 %v396
  %420 = vmatprep.subr.bf16.mxu0 0
  %421 = vmatpush1.bf16.msra.mxu0 %v397
  %422 = vmatprep.subr.bf16.mxu0 0
  %423 = vmatpush1.bf16.msra.mxu0 0
  %424 = vmatprep.subr.bf16.mxu0 0
  %425 = vmatpush1.bf16.msra.mxu0 0
  %426 = vmatprep.subr.bf16.mxu0 0
  %427 = vmatpush1.bf16.msra.mxu0 0
  %428 = vmatprep.subr.bf16.mxu0 0
  %429 = vmatpush1.bf16.msra.mxu0 0
  %430 = vmatprep.subr.bf16.mxu0 0
  %431 = vmatpush1.bf16.msra.mxu0 0
  %432 = vmatprep.subr.bf16.mxu0 0
  %433 = vmatpush1.bf16.msra.mxu0 0
  %434 = vmatprep.subr.bf16.mxu0 0
  %435 = vmatpush1.bf16.msra.mxu0 0
  %436 = vmatprep.subr.bf16.mxu0 0
  %437 = vmatpush1.bf16.msra.mxu0 0
  %438 = vmatprep.mubr.bf16.mxu0 0
  %439 = vmatmul.mubr.bf16.gmra.mrb[0].mxu0 %v334
  %v440 = vpop.f32.mrb[0].mxu0
  %v441 = vadd.f32 %v356, %v440
  %v442 = vpop.f32.mrb[0].mxu0
  %v443 = vpop.f32.mrb[0].mxu0
  %v444 = vpop.f32.mrb[0].mxu0
  %445 = vdwg.mxu0
  %v446 = vmax.f32 %v441, 0.0
  %v447 = vpack.c.bf16 %v446, %v446
  %v448 = vld [vmem:[%s5] sm:$0xf]
  %v449 = vld [vmem:[%s5 + $0x4] sm:$0xf]
  %v450 = vld [vmem:[%s5 + $0x8] sm:$0xf]
  %v451 = vld [vmem:[%s5 + $0xc] sm:$0xf]
  %v452 = vld [vmem:[%s5 + $0x10] sm:$0xf]
  %v453 = vld [vmem:[%s5 + $0x14] sm:$0xf]
  %v454 = vld [vmem:[%s5 + $0x18] sm:$0xf]
  %v455 = vld [vmem:[%s5 + $0x1c] sm:$0xf]
  %v456 = vld [vmem:[%s5 + $0x20] sm:$0xf]
  %v457 = vld [vmem:[%s5 + $0x24] sm:$0xf]
  %v458 = vld [vmem:[%s5 + $0x28] sm:$0xf]
  %v459 = vld [vmem:[%s5 + $0x2c] sm:$0xf]
  %v460 = vld [vmem:[%s5 + $0x30] sm:$0xf]
  %v461 = vld [vmem:[%s5 + $0x34] sm:$0xf]
  %v462 = vld [vmem:[%s5 + $0x38] sm:$0xf]
  %v463 = vld [vmem:[%s5 + $0x3c] sm:$0xf]
  %v464 = vld [vmem:[%s6] sm:$0x1]
  %v466 = vlaneseq
  %v467 = vshrl.u32 %v466, 7
  %v468 = vsub.s32 0, %v467
  %v469 = vrot.slane %v464, %v468
  %v487 = vunpack.c.l.b16 %v448
  %v488 = vunpack.c.l.b16 %v449
  %v489 = vunpack.c.l.b16 %v450
  %v490 = vunpack.c.l.b16 %v451
  %v491 = vunpack.c.l.b16 %v452
  %v492 = vunpack.c.l.b16 %v453
  %v493 = vunpack.c.l.b16 %v454
  %v494 = vunpack.c.l.b16 %v455
  %v495 = vunpack.c.l.b16 %v456
  %v496 = vunpack.c.l.b16 %v457
  %v497 = vunpack.c.l.b16 %v458
  %v498 = vunpack.c.l.b16 %v459
  %v499 = vunpack.c.l.b16 %v460
  %v500 = vunpack.c.l.b16 %v461
  %v501 = vunpack.c.l.b16 %v462
  %v502 = vunpack.c.l.b16 %v463
  %v503 = vpack.c.b16 %v488, %v487
  %v504 = vpack.c.b16 %v490, %v489
  %v505 = vpack.c.b16 %v492, %v491
  %v506 = vpack.c.b16 %v494, %v493
  %v507 = vpack.c.b16 %v496, %v495
  %v508 = vpack.c.b16 %v498, %v497
  %v509 = vpack.c.b16 %v500, %v499
  %v510 = vpack.c.b16 %v502, %v501
  %519 = vmatprep.subr.bf16.mxu0 0
  %520 = vmatpush1.bf16.msra.mxu0 %v503
  %521 = vmatprep.subr.bf16.mxu0 0
  %522 = vmatpush1.bf16.msra.mxu0 %v504
  %523 = vmatprep.subr.bf16.mxu0 0
  %524 = vmatpush1.bf16.msra.mxu0 %v505
  %525 = vmatprep.subr.bf16.mxu0 0
  %526 = vmatpush1.bf16.msra.mxu0 %v506
  %527 = vmatprep.subr.bf16.mxu0 0
  %528 = vmatpush1.bf16.msra.mxu0 %v507
  %529 = vmatprep.subr.bf16.mxu0 0
  %530 = vmatpush1.bf16.msra.mxu0 %v508
  %531 = vmatprep.subr.bf16.mxu0 0
  %532 = vmatpush1.bf16.msra.mxu0 %v509
  %533 = vmatprep.subr.bf16.mxu0 0
  %534 = vmatpush1.bf16.msra.mxu0 %v510
  %535 = vmatprep.subr.bf16.mxu0 0
  %536 = vmatpush1.bf16.msra.mxu0 0
  %537 = vmatprep.subr.bf16.mxu0 0
  %538 = vmatpush1.bf16.msra.mxu0 0
  %539 = vmatprep.subr.bf16.mxu0 0
  %540 = vmatpush1.bf16.msra.mxu0 0
  %541 = vmatprep.subr.bf16.mxu0 0
  %542 = vmatpush1.bf16.msra.mxu0 0
  %543 = vmatprep.subr.bf16.mxu0 0
  %544 = vmatpush1.bf16.msra.mxu0 0
  %545 = vmatprep.subr.bf16.mxu0 0
  %546 = vmatpush1.bf16.msra.mxu0 0
  %547 = vmatprep.subr.bf16.mxu0 0
  %548 = vmatpush1.bf16.msra.mxu0 0
  %549 = vmatprep.subr.bf16.mxu0 0
  %550 = vmatpush1.bf16.msra.mxu0 0
  %551 = vmatprep.mubr.bf16.mxu0 0
  %552 = vmatmul.mubr.bf16.gmra.mrb[0].mxu0 %v447
  %v553 = vpop.f32.mrb[0].mxu0
  %v554 = vadd.f32 %v469, %v553
  %v555 = vpop.f32.mrb[0].mxu0
  %v556 = vpop.f32.mrb[0].mxu0
  %v557 = vpop.f32.mrb[0].mxu0
  %558 = vdwg.mxu0
  %559 = vst [vmem:[%s7] sm:$0xff] %v554
  // Predicated region
  $region30: #{lenet_forward.5} parent=0 // pred_check
    _
  $region31: #{lenet_forward.5} parent=0 // pred_check_branch
    %561 = sbr.rel (0) target = $region33
  $region32: #{lenet_forward.5} parent=0 // pred_region
    _
  $region33: #{lenet_forward.5} parent=0 // pred_fallthru
    _
  // Predicated region
  $region34: #{lenet_forward.5} parent=0 // pred_check
    _
  $region35: #{lenet_forward.5} parent=0 // pred_check_branch
    %563 = sbr.rel (0) target = $region37
  $region36: #{lenet_forward.5} parent=0 // pred_region
    _
  $region37: #{lenet_forward.5} parent=0 // pred_fallthru
    _

</llo_original>
